<compile_context>
chip_gen: v6e
topology: v6e:2x2x1
jax: 0.10.0
libtpu: 0.0.40
codegen_flags: <defaults>
</compile_context>

<pallas_src>
import jax
import jax.numpy as jnp
import numpy as np
from jax.experimental import pallas as pl
from jax.experimental.pallas import tpu as pltpu

# ----------------------------- model dims (small) ----------------------------
BATCH = 8
INPUT_DIM = 16
HIDDEN_DIM = 32
LATENT_DIM = 8
NUM_BLOCKS = 3

LANES = 128
PACK = LANES // HIDDEN_DIM        # batch rows packed per vreg row (= 4)

assert LANES % HIDDEN_DIM == 0
assert INPUT_DIM <= HIDDEN_DIM
assert 2 * LATENT_DIM + 1 <= HIDDEN_DIM   # mu | s | energy fit in one group

# ---- indices into the packed weight stack W [N_W, 128, 128] ------------------
IDX_W_B1 = [2 * i for i in range(NUM_BLOCKS)]        # ResNet block, linear 1
IDX_W_B2 = [2 * i + 1 for i in range(NUM_BLOCKS)]    # ResNet block, linear 2
IDX_W_OUT = 2 * NUM_BLOCKS                           # feature_net fc_out
IDX_W_MS = IDX_W_OUT + 1                             # latent_net (mu | log_var)
IDX_W_H1 = IDX_W_OUT + 2                             # fused (q|p heads) @ h_net L1
IDX_W_H2 = IDX_W_OUT + 3                             # h_net L2
IDX_W_H3 = IDX_W_OUT + 4                             # h_net L3 (energy -> lane 2L)
N_W = IDX_W_H3 + 1

# ---- indices into the packed bias stack V [N_V, 1, 128] ----------------------
IDX_B_IN = 0
IDX_B_B1 = [1 + 2 * i for i in range(NUM_BLOCKS)]
IDX_B_B2 = [2 + 2 * i for i in range(NUM_BLOCKS)]
IDX_B_OUT = 1 + 2 * NUM_BLOCKS
IDX_B_MS = IDX_B_OUT + 1
IDX_B_H1 = IDX_B_OUT + 2
IDX_B_H2 = IDX_B_OUT + 3
IDX_B_H3 = IDX_B_OUT + 4
N_V = IDX_B_H3 + 1


# ------------------------------- Pallas kernel -------------------------------
def hamiltonian_encoder_kernel(x_ref, win_ref, w_ref, v_ref, out_ref):
    f32 = jnp.float32

    def lin(h, wi, vi):
        return jnp.dot(h, w_ref[wi], preferred_element_type=f32) + v_ref[vi]

    def swish(v):
        return v * jax.nn.sigmoid(v)

    # x: [TB, PACK*INPUT_DIM]  (4 batch rows packed per row, 16 lanes per group)
    x = x_ref[...].astype(f32)
    h = swish(jnp.dot(x, win_ref[...], preferred_element_type=f32) + v_ref[IDX_B_IN])

    # ---------------- feature_net (MLP ResNet), static unroll ----------------
    for blk in range(NUM_BLOCKS):
        h1 = swish(lin(h, IDX_W_B1[blk], IDX_B_B1[blk]))
        h2 = lin(h1, IDX_W_B2[blk], IDX_B_B2[blk])
        h = swish(h + h2)
    feats = lin(h, IDX_W_OUT, IDX_B_OUT)

    # ---------------- latent head: per group lanes [0:L)=mu, [L:2L)=s --------
    ms = lin(feats, IDX_W_MS, IDX_B_MS)
    lane = jax.lax.broadcasted_iota(jnp.int32, ms.shape, 1) % HIDDEN_DIM
    ms_sel = jnp.where(
        lane < LATENT_DIM, ms,
        jnp.where(lane < 2 * LATENT_DIM, jnp.exp(0.5 * ms), 0.0))

    # ---------------- h_net (q|p head pre-fused into layer 1 host-side) ------
    e = swish(lin(feats, IDX_W_H1, IDX_B_H1))
    e = swish(lin(e, IDX_W_H2, IDX_B_H2))
    # final [H -> 1] layer packed so the energy lands directly in lane 2L of
    # each 32-lane group; all other lanes of `energy` are exactly zero.
    energy = lin(e, IDX_W_H3, IDX_B_H3)

    # single unmasked full-width store (lanes 2L+1..31 of each group are zero)
    out_ref[...] = ms_sel + energy


# ------------------------------- param packing -------------------------------
def pack_params(p):
    H, L, f32 = HIDDEN_DIM, LATENT_DIM, jnp.float32
    eye = jnp.eye(PACK, dtype=f32)

    def packw(w):   # [H, H] -> 4-way block-diagonal [128, 128]
        return jnp.kron(eye, jnp.asarray(w, f32))

    def packv(b):   # [1, H] -> 4x tiled [1, 128]
        return jnp.tile(jnp.asarray(b, f32).reshape(1, H), (1, PACK))

    w_slots = [None] * N_W
    v_slots = [None] * N_V

    # input layer: [INPUT_DIM, H] -> block-diag [PACK*INPUT_DIM, 128] (own operand)
    Win = jnp.kron(eye, jnp.asarray(p["w_in"], f32))
    v_slots[IDX_B_IN] = packv(p["b_in"])

    for i in range(NUM_BLOCKS):
        w_slots[IDX_W_B1[i]] = packw(p["wb1"][i])
        v_slots[IDX_B_B1[i]] = packv(p["bb1"][i])
        w_slots[IDX_W_B2[i]] = packw(p["wb2"][i])
        v_slots[IDX_B_B2[i]] = packv(p["bb2"][i])
    w_slots[IDX_W_OUT] = packw(p["w_out"])
    v_slots[IDX_B_OUT] = packv(p["b_out"])

    # latent_net (mu | log_var) into lanes [0:2L) of each group
    w_ms = jnp.zeros((H, H), f32).at[:, : 2 * L].set(jnp.asarray(p["w_lat"], f32))
    b_ms = jnp.zeros((1, H), f32).at[:, : 2 * L].set(
        jnp.asarray(p["b_lat"], f32).reshape(1, -1))
    w_slots[IDX_W_MS] = packw(w_ms)
    v_slots[IDX_B_MS] = packv(b_ms)

    # host-side fusion: z = feats @ [w_q|w_p] + [b_q|b_p]; h_net L1 on z.
    # No nonlinearity in between, so compose the two linear maps exactly.
    w_qp = jnp.concatenate([jnp.asarray(p["w_q"], f32), jnp.asarray(p["w_p"], f32)], axis=1)
    b_qp = jnp.concatenate([jnp.asarray(p["b_q"], f32), jnp.asarray(p["b_p"], f32)], axis=1)
    w_h1f = w_qp @ jnp.asarray(p["w_h1"], f32)
    b_h1f = b_qp @ jnp.asarray(p["w_h1"], f32) + jnp.asarray(p["b_h1"], f32).reshape(1, -1)
    w_slots[IDX_W_H1] = packw(w_h1f)
    v_slots[IDX_B_H1] = packv(b_h1f)

    w_slots[IDX_W_H2] = packw(p["w_h2"])
    v_slots[IDX_B_H2] = packv(p["b_h2"])

    # final [H -> 1] energy layer: route result to lane 2L of each group
    w_h3 = jnp.zeros((H, H), f32).at[:, 2 * L].set(jnp.asarray(p["w_h3"], f32).reshape(-1))
    b_h3 = jnp.zeros((1, H), f32).at[:, 2 * L].set(jnp.asarray(p["b_h3"], f32).reshape(-1))
    w_slots[IDX_W_H3] = packw(w_h3)
    v_slots[IDX_B_H3] = packv(b_h3)

    W = jnp.stack(w_slots)   # [N_W, 128, 128]  (~704 KB f32, VMEM-resident)
    V = jnp.stack(v_slots)   # [N_V, 1, 128]
    return Win, W, V


# --------------------------------- wrapper -----------------------------------
def hamiltonian_encoder(x, packed):
    Win, W, V = packed
    B = x.shape[0]

    # pack 4 batch rows per vreg row
    B4 = ((B + PACK - 1) // PACK) * PACK
    R = B4 // PACK                                   # packed rows

    # row tile: single tile for small batches; otherwise >=2 tiles of a
    # multiple of 8 rows (so v7x's 2 TensorCores both get work), capped at 1024.
    if R <= 8:
        TB = R
        R_pad = R
    else:
        TB = min(1024, ((R + 15) // 16) * 8)         # ~ceil(R/2) rounded up to 8
        R_pad = ((R + TB - 1) // TB) * TB

    x = x.astype(jnp.float32)
    if B4 != B:
        x = jnp.pad(x, ((0, B4 - B), (0, 0)))
    xp = x.reshape(R, PACK * INPUT_DIM)              # contiguous reshape, no fill
    if R_pad != R:
        xp = jnp.pad(xp, ((0, R_pad - R), (0, 0)))

    grid = (R_pad // TB,)
    out = pl.pallas_call(
        hamiltonian_encoder_kernel,
        out_shape=jax.ShapeDtypeStruct((R_pad, LANES), jnp.float32),
        grid=grid,
        in_specs=[
            pl.BlockSpec((TB, PACK * INPUT_DIM), lambda i: (i, 0)),
            pl.BlockSpec((PACK * INPUT_DIM, LANES), lambda i: (0, 0)),   # resident
            pl.BlockSpec((N_W, LANES, LANES), lambda i: (0, 0, 0)),      # resident
            pl.BlockSpec((N_V, 1, LANES), lambda i: (0, 0, 0)),          # resident
        ],
        out_specs=pl.BlockSpec((TB, LANES), lambda i: (i, 0)),
        compiler_params=pltpu.CompilerParams(
            dimension_semantics=("parallel",),       # batch tiles are independent
        ),
    )(xp, Win, W, V)

    # unpack: out[r, 32g:32g+32] holds mu|s|energy|zeros for batch row 4r+g
    res = out.reshape(R_pad * PACK, HIDDEN_DIM)[:B]
    mu = res[:, :LATENT_DIM]
    s = res[:, LATENT_DIM: 2 * LATENT_DIM]
    energy = res[:, 2 * LATENT_DIM: 2 * LATENT_DIM + 1]
    return mu, s, energy


# ------------------------- deterministic param init --------------------------
def init_params(key):
    def linear(key, fan_in, fan_out):
        kw, kb = jax.random.split(key)
        bound = 1.0 / np.sqrt(fan_in)
        w = jax.random.uniform(kw, (fan_in, fan_out), jnp.float32, -bound, bound)
        b = jax.random.uniform(kb, (1, fan_out), jnp.float32, -bound, bound)
        return w, b

    keys = jax.random.split(key, 16)
    p = {}
    # feature_net
    p["w_in"], p["b_in"] = linear(keys[0], INPUT_DIM, HIDDEN_DIM)
    wb1, bb1, wb2, bb2 = [], [], [], []
    for i in range(NUM_BLOCKS):
        w1, b1 = linear(keys[1 + 2 * i], HIDDEN_DIM, HIDDEN_DIM)
        w2, b2 = linear(keys[2 + 2 * i], HIDDEN_DIM, HIDDEN_DIM)
        wb1.append(w1); bb1.append(b1); wb2.append(w2); bb2.append(b2)
    p["wb1"] = jnp.stack(wb1)
    p["bb1"] = jnp.stack(bb1)
    p["wb2"] = jnp.stack(wb2)
    p["bb2"] = jnp.stack(bb2)
    p["w_out"], p["b_out"] = linear(keys[7], HIDDEN_DIM, HIDDEN_DIM)
    # heads
    p["w_lat"], p["b_lat"] = linear(keys[8], HIDDEN_DIM, 2 * LATENT_DIM)
    p["w_q"], p["b_q"] = linear(keys[9], HIDDEN_DIM, LATENT_DIM)
    p["w_p"], p["b_p"] = linear(keys[10], HIDDEN_DIM, LATENT_DIM)
    # h_net
    p["w_h1"], p["b_h1"] = linear(keys[11], 2 * LATENT_DIM, HIDDEN_DIM)
    p["w_h2"], p["b_h2"] = linear(keys[12], HIDDEN_DIM, HIDDEN_DIM)
    p["w_h3"], p["b_h3"] = linear(keys[13], HIDDEN_DIM, 1)
    return p


# ----------------------------- pure-JAX reference ----------------------------
def _swish_ref(v):
    return v * jax.nn.sigmoid(v)


def reference(x, p):
    h = _swish_ref(x @ p["w_in"] + p["b_in"])
    for i in range(NUM_BLOCKS):
        h1 = _swish_ref(h @ p["wb1"][i] + p["bb1"][i])
        h2 = h1 @ p["wb2"][i] + p["bb2"][i]
        h = _swish_ref(h + h2)
    feats = h @ p["w_out"] + p["b_out"]
    lp = feats @ p["w_lat"] + p["b_lat"]
    mu, log_var = lp[:, :LATENT_DIM], lp[:, LATENT_DIM:]
    s = jnp.exp(0.5 * log_var)
    q = feats @ p["w_q"] + p["b_q"]
    pm = feats @ p["w_p"] + p["b_p"]
    z = jnp.concatenate([q, pm], axis=1)
    e = _swish_ref(z @ p["w_h1"] + p["b_h1"])
    e = _swish_ref(e @ p["w_h2"] + p["b_h2"])
    energy = e @ p["w_h3"] + p["b_h3"]
    return mu, s, energy


if __name__ == "__main__":
    key = jax.random.PRNGKey(0)
    kx, kp = jax.random.split(key)
    x = jax.random.normal(kx, (BATCH, INPUT_DIM), jnp.float32)
    params = init_params(kp)
    packed = pack_params(params)

    mu, s, energy = hamiltonian_encoder(x, packed)
    jax.block_until_ready((mu, s, energy))

    mu_r, s_r, e_r = reference(x, params)
    np.testing.assert_allclose(np.asarray(mu), np.asarray(mu_r), rtol=1e-5, atol=1e-5)
    np.testing.assert_allclose(np.asarray(s), np.asarray(s_r), rtol=1e-5, atol=1e-5)
    np.testing.assert_allclose(np.asarray(energy), np.asarray(e_r), rtol=1e-5, atol=1e-5)

    assert mu.shape == (BATCH, LATENT_DIM)
    assert s.shape == (BATCH, LATENT_DIM)
    assert energy.shape == (BATCH, 1)
    print("KERNEL_OK")
</pallas_src>

<mosaic_0001>
module attributes {stable_mosaic.version = 11 : i64} {
  func.func @hamiltonian_encoder_kernel(%arg0: i32, %arg1: memref<2x64xf32, #tpu.memory_space<vmem>>, %arg2: memref<64x128xf32, #tpu.memory_space<vmem>>, %arg3: memref<11x128x128xf32, #tpu.memory_space<vmem>>, %arg4: memref<12x1x128xf32, #tpu.memory_space<vmem>>, %arg5: memref<2x128xf32, #tpu.memory_space<vmem>>) attributes {dimension_semantics = [#tpu.dimension_semantics<parallel>], iteration_bounds = array<i64: 1>, scalar_prefetch = 0 : i64, scratch_operands = 0 : i64, tpu.core_type = #tpu.core_type<tc>, window_params = [{transform_indices = @transform_0, window_bounds = array<i64: 2, 64>}, {pipeline_mode = #tpu.pipeline_mode<synchronous>, transform_indices = @transform_1, window_bounds = array<i64: 64, 128>}, {pipeline_mode = #tpu.pipeline_mode<synchronous>, transform_indices = @transform_2, window_bounds = array<i64: 11, 128, 128>}, {pipeline_mode = #tpu.pipeline_mode<synchronous>, transform_indices = @transform_3, window_bounds = array<i64: 12, 1, 128>}, {transform_indices = @transform_4, window_bounds = array<i64: 2, 128>}]} {
    %c0 = arith.constant 0 : index
    %c0_0 = arith.constant 0 : index
    %0 = vector.load %arg1[%c0, %c0_0] : memref<2x64xf32, #tpu.memory_space<vmem>>, vector<2x64xf32>
    %c0_1 = arith.constant 0 : index
    %c0_2 = arith.constant 0 : index
    %1 = vector.load %arg2[%c0_1, %c0_2] : memref<64x128xf32, #tpu.memory_space<vmem>>, vector<64x128xf32>
    %cst = arith.constant dense<0.000000e+00> : vector<2x128xf32>
    %2 = tpu.matmul %0, %1, %cst {dimension_numbers = #tpu.dot_dimension_numbers<[1], [0], [0], [1], [0, 0, 1, 1], [], []>} : vector<2x64xf32>, vector<64x128xf32>, vector<2x128xf32> -> vector<2x128xf32>
    %c0_3 = arith.constant 0 : index
    %c0_4 = arith.constant 0 : index
    %c0_5 = arith.constant 0 : index
    %3 = vector.load %arg4[%c0_3, %c0_4, %c0_5] : memref<12x1x128xf32, #tpu.memory_space<vmem>>, vector<1x1x128xf32>
    %4 = vector.shape_cast %3 : vector<1x1x128xf32> to vector<1x128xf32>
    %5 = vector.broadcast %4 : vector<1x128xf32> to vector<2x128xf32>
    %6 = arith.addf %2, %5 : vector<2x128xf32>
    %7 = arith.negf %6 : vector<2x128xf32>
    %8 = math.exp %7 : vector<2x128xf32>
    %cst_6 = arith.constant 1.000000e+00 : f32
    %9 = vector.broadcast %cst_6 : f32 to vector<2x128xf32>
    %10 = arith.addf %9, %8 : vector<2x128xf32>
    %11 = arith.divf %9, %10 : vector<2x128xf32>
    %12 = arith.mulf %6, %11 : vector<2x128xf32>
    %c0_7 = arith.constant 0 : index
    %c0_8 = arith.constant 0 : index
    %c0_9 = arith.constant 0 : index
    %13 = vector.load %arg3[%c0_7, %c0_8, %c0_9] : memref<11x128x128xf32, #tpu.memory_space<vmem>>, vector<1x128x128xf32>
    %14 = vector.shape_cast %13 : vector<1x128x128xf32> to vector<128x128xf32>
    %cst_10 = arith.constant dense<0.000000e+00> : vector<2x128xf32>
    %15 = tpu.matmul %12, %14, %cst_10 {dimension_numbers = #tpu.dot_dimension_numbers<[1], [0], [0], [1], [0, 0, 1, 1], [], []>} : vector<2x128xf32>, vector<128x128xf32>, vector<2x128xf32> -> vector<2x128xf32>
    %c1 = arith.constant 1 : index
    %c0_11 = arith.constant 0 : index
    %c0_12 = arith.constant 0 : index
    %16 = vector.load %arg4[%c1, %c0_11, %c0_12] : memref<12x1x128xf32, #tpu.memory_space<vmem>>, vector<1x1x128xf32>
    %17 = vector.shape_cast %16 : vector<1x1x128xf32> to vector<1x128xf32>
    %18 = vector.broadcast %17 : vector<1x128xf32> to vector<2x128xf32>
    %19 = arith.addf %15, %18 : vector<2x128xf32>
    %20 = arith.negf %19 : vector<2x128xf32>
    %21 = math.exp %20 : vector<2x128xf32>
    %cst_13 = arith.constant 1.000000e+00 : f32
    %22 = vector.broadcast %cst_13 : f32 to vector<2x128xf32>
    %23 = arith.addf %22, %21 : vector<2x128xf32>
    %24 = arith.divf %22, %23 : vector<2x128xf32>
    %25 = arith.mulf %19, %24 : vector<2x128xf32>
    %c1_14 = arith.constant 1 : index
    %c0_15 = arith.constant 0 : index
    %c0_16 = arith.constant 0 : index
    %26 = vector.load %arg3[%c1_14, %c0_15, %c0_16] : memref<11x128x128xf32, #tpu.memory_space<vmem>>, vector<1x128x128xf32>
    %27 = vector.shape_cast %26 : vector<1x128x128xf32> to vector<128x128xf32>
    %cst_17 = arith.constant dense<0.000000e+00> : vector<2x128xf32>
    %28 = tpu.matmul %25, %27, %cst_17 {dimension_numbers = #tpu.dot_dimension_numbers<[1], [0], [0], [1], [0, 0, 1, 1], [], []>} : vector<2x128xf32>, vector<128x128xf32>, vector<2x128xf32> -> vector<2x128xf32>
    %c2 = arith.constant 2 : index
    %c0_18 = arith.constant 0 : index
    %c0_19 = arith.constant 0 : index
    %29 = vector.load %arg4[%c2, %c0_18, %c0_19] : memref<12x1x128xf32, #tpu.memory_space<vmem>>, vector<1x1x128xf32>
    %30 = vector.shape_cast %29 : vector<1x1x128xf32> to vector<1x128xf32>
    %31 = vector.broadcast %30 : vector<1x128xf32> to vector<2x128xf32>
    %32 = arith.addf %28, %31 : vector<2x128xf32>
    %33 = arith.addf %12, %32 : vector<2x128xf32>
    %34 = arith.negf %33 : vector<2x128xf32>
    %35 = math.exp %34 : vector<2x128xf32>
    %cst_20 = arith.constant 1.000000e+00 : f32
    %36 = vector.broadcast %cst_20 : f32 to vector<2x128xf32>
    %37 = arith.addf %36, %35 : vector<2x128xf32>
    %38 = arith.divf %36, %37 : vector<2x128xf32>
    %39 = arith.mulf %33, %38 : vector<2x128xf32>
    %c2_21 = arith.constant 2 : index
    %c0_22 = arith.constant 0 : index
    %c0_23 = arith.constant 0 : index
    %40 = vector.load %arg3[%c2_21, %c0_22, %c0_23] : memref<11x128x128xf32, #tpu.memory_space<vmem>>, vector<1x128x128xf32>
    %41 = vector.shape_cast %40 : vector<1x128x128xf32> to vector<128x128xf32>
    %cst_24 = arith.constant dense<0.000000e+00> : vector<2x128xf32>
    %42 = tpu.matmul %39, %41, %cst_24 {dimension_numbers = #tpu.dot_dimension_numbers<[1], [0], [0], [1], [0, 0, 1, 1], [], []>} : vector<2x128xf32>, vector<128x128xf32>, vector<2x128xf32> -> vector<2x128xf32>
    %c3 = arith.constant 3 : index
    %c0_25 = arith.constant 0 : index
    %c0_26 = arith.constant 0 : index
    %43 = vector.load %arg4[%c3, %c0_25, %c0_26] : memref<12x1x128xf32, #tpu.memory_space<vmem>>, vector<1x1x128xf32>
    %44 = vector.shape_cast %43 : vector<1x1x128xf32> to vector<1x128xf32>
    %45 = vector.broadcast %44 : vector<1x128xf32> to vector<2x128xf32>
    %46 = arith.addf %42, %45 : vector<2x128xf32>
    %47 = arith.negf %46 : vector<2x128xf32>
    %48 = math.exp %47 : vector<2x128xf32>
    %cst_27 = arith.constant 1.000000e+00 : f32
    %49 = vector.broadcast %cst_27 : f32 to vector<2x128xf32>
    %50 = arith.addf %49, %48 : vector<2x128xf32>
    %51 = arith.divf %49, %50 : vector<2x128xf32>
    %52 = arith.mulf %46, %51 : vector<2x128xf32>
    %c3_28 = arith.constant 3 : index
    %c0_29 = arith.constant 0 : index
    %c0_30 = arith.constant 0 : index
    %53 = vector.load %arg3[%c3_28, %c0_29, %c0_30] : memref<11x128x128xf32, #tpu.memory_space<vmem>>, vector<1x128x128xf32>
    %54 = vector.shape_cast %53 : vector<1x128x128xf32> to vector<128x128xf32>
    %cst_31 = arith.constant dense<0.000000e+00> : vector<2x128xf32>
    %55 = tpu.matmul %52, %54, %cst_31 {dimension_numbers = #tpu.dot_dimension_numbers<[1], [0], [0], [1], [0, 0, 1, 1], [], []>} : vector<2x128xf32>, vector<128x128xf32>, vector<2x128xf32> -> vector<2x128xf32>
    %c4 = arith.constant 4 : index
    %c0_32 = arith.constant 0 : index
    %c0_33 = arith.constant 0 : index
    %56 = vector.load %arg4[%c4, %c0_32, %c0_33] : memref<12x1x128xf32, #tpu.memory_space<vmem>>, vector<1x1x128xf32>
    %57 = vector.shape_cast %56 : vector<1x1x128xf32> to vector<1x128xf32>
    %58 = vector.broadcast %57 : vector<1x128xf32> to vector<2x128xf32>
    %59 = arith.addf %55, %58 : vector<2x128xf32>
    %60 = arith.addf %39, %59 : vector<2x128xf32>
    %61 = arith.negf %60 : vector<2x128xf32>
    %62 = math.exp %61 : vector<2x128xf32>
    %cst_34 = arith.constant 1.000000e+00 : f32
    %63 = vector.broadcast %cst_34 : f32 to vector<2x128xf32>
    %64 = arith.addf %63, %62 : vector<2x128xf32>
    %65 = arith.divf %63, %64 : vector<2x128xf32>
    %66 = arith.mulf %60, %65 : vector<2x128xf32>
    %c4_35 = arith.constant 4 : index
    %c0_36 = arith.constant 0 : index
    %c0_37 = arith.constant 0 : index
    %67 = vector.load %arg3[%c4_35, %c0_36, %c0_37] : memref<11x128x128xf32, #tpu.memory_space<vmem>>, vector<1x128x128xf32>
    %68 = vector.shape_cast %67 : vector<1x128x128xf32> to vector<128x128xf32>
    %cst_38 = arith.constant dense<0.000000e+00> : vector<2x128xf32>
    %69 = tpu.matmul %66, %68, %cst_38 {dimension_numbers = #tpu.dot_dimension_numbers<[1], [0], [0], [1], [0, 0, 1, 1], [], []>} : vector<2x128xf32>, vector<128x128xf32>, vector<2x128xf32> -> vector<2x128xf32>
    %c5 = arith.constant 5 : index
    %c0_39 = arith.constant 0 : index
    %c0_40 = arith.constant 0 : index
    %70 = vector.load %arg4[%c5, %c0_39, %c0_40] : memref<12x1x128xf32, #tpu.memory_space<vmem>>, vector<1x1x128xf32>
    %71 = vector.shape_cast %70 : vector<1x1x128xf32> to vector<1x128xf32>
    %72 = vector.broadcast %71 : vector<1x128xf32> to vector<2x128xf32>
    %73 = arith.addf %69, %72 : vector<2x128xf32>
    %74 = arith.negf %73 : vector<2x128xf32>
    %75 = math.exp %74 : vector<2x128xf32>
    %cst_41 = arith.constant 1.000000e+00 : f32
    %76 = vector.broadcast %cst_41 : f32 to vector<2x128xf32>
    %77 = arith.addf %76, %75 : vector<2x128xf32>
    %78 = arith.divf %76, %77 : vector<2x128xf32>
    %79 = arith.mulf %73, %78 : vector<2x128xf32>
    %c5_42 = arith.constant 5 : index
    %c0_43 = arith.constant 0 : index
    %c0_44 = arith.constant 0 : index
    %80 = vector.load %arg3[%c5_42, %c0_43, %c0_44] : memref<11x128x128xf32, #tpu.memory_space<vmem>>, vector<1x128x128xf32>
    %81 = vector.shape_cast %80 : vector<1x128x128xf32> to vector<128x128xf32>
    %cst_45 = arith.constant dense<0.000000e+00> : vector<2x128xf32>
    %82 = tpu.matmul %79, %81, %cst_45 {dimension_numbers = #tpu.dot_dimension_numbers<[1], [0], [0], [1], [0, 0, 1, 1], [], []>} : vector<2x128xf32>, vector<128x128xf32>, vector<2x128xf32> -> vector<2x128xf32>
    %c6 = arith.constant 6 : index
    %c0_46 = arith.constant 0 : index
    %c0_47 = arith.constant 0 : index
    %83 = vector.load %arg4[%c6, %c0_46, %c0_47] : memref<12x1x128xf32, #tpu.memory_space<vmem>>, vector<1x1x128xf32>
    %84 = vector.shape_cast %83 : vector<1x1x128xf32> to vector<1x128xf32>
    %85 = vector.broadcast %84 : vector<1x128xf32> to vector<2x128xf32>
    %86 = arith.addf %82, %85 : vector<2x128xf32>
    %87 = arith.addf %66, %86 : vector<2x128xf32>
    %88 = arith.negf %87 : vector<2x128xf32>
    %89 = math.exp %88 : vector<2x128xf32>
    %cst_48 = arith.constant 1.000000e+00 : f32
    %90 = vector.broadcast %cst_48 : f32 to vector<2x128xf32>
    %91 = arith.addf %90, %89 : vector<2x128xf32>
    %92 = arith.divf %90, %91 : vector<2x128xf32>
    %93 = arith.mulf %87, %92 : vector<2x128xf32>
    %c6_49 = arith.constant 6 : index
    %c0_50 = arith.constant 0 : index
    %c0_51 = arith.constant 0 : index
    %94 = vector.load %arg3[%c6_49, %c0_50, %c0_51] : memref<11x128x128xf32, #tpu.memory_space<vmem>>, vector<1x128x128xf32>
    %95 = vector.shape_cast %94 : vector<1x128x128xf32> to vector<128x128xf32>
    %cst_52 = arith.constant dense<0.000000e+00> : vector<2x128xf32>
    %96 = tpu.matmul %93, %95, %cst_52 {dimension_numbers = #tpu.dot_dimension_numbers<[1], [0], [0], [1], [0, 0, 1, 1], [], []>} : vector<2x128xf32>, vector<128x128xf32>, vector<2x128xf32> -> vector<2x128xf32>
    %c7 = arith.constant 7 : index
    %c0_53 = arith.constant 0 : index
    %c0_54 = arith.constant 0 : index
    %97 = vector.load %arg4[%c7, %c0_53, %c0_54] : memref<12x1x128xf32, #tpu.memory_space<vmem>>, vector<1x1x128xf32>
    %98 = vector.shape_cast %97 : vector<1x1x128xf32> to vector<1x128xf32>
    %99 = vector.broadcast %98 : vector<1x128xf32> to vector<2x128xf32>
    %100 = arith.addf %96, %99 : vector<2x128xf32>
    %c7_55 = arith.constant 7 : index
    %c0_56 = arith.constant 0 : index
    %c0_57 = arith.constant 0 : index
    %101 = vector.load %arg3[%c7_55, %c0_56, %c0_57] : memref<11x128x128xf32, #tpu.memory_space<vmem>>, vector<1x128x128xf32>
    %102 = vector.shape_cast %101 : vector<1x128x128xf32> to vector<128x128xf32>
    %cst_58 = arith.constant dense<0.000000e+00> : vector<2x128xf32>
    %103 = tpu.matmul %100, %102, %cst_58 {dimension_numbers = #tpu.dot_dimension_numbers<[1], [0], [0], [1], [0, 0, 1, 1], [], []>} : vector<2x128xf32>, vector<128x128xf32>, vector<2x128xf32> -> vector<2x128xf32>
    %c8 = arith.constant 8 : index
    %c0_59 = arith.constant 0 : index
    %c0_60 = arith.constant 0 : index
    %104 = vector.load %arg4[%c8, %c0_59, %c0_60] : memref<12x1x128xf32, #tpu.memory_space<vmem>>, vector<1x1x128xf32>
    %105 = vector.shape_cast %104 : vector<1x1x128xf32> to vector<1x128xf32>
    %106 = vector.broadcast %105 : vector<1x128xf32> to vector<2x128xf32>
    %107 = arith.addf %103, %106 : vector<2x128xf32>
    %108 = tpu.iota {dimensions = array<i32: 1>} : vector<2x128xi32>
    %c32_i32 = arith.constant 32 : i32
    %c0_i32 = arith.constant 0 : i32
    %109 = arith.cmpi eq, %c32_i32, %c0_i32 : i32
    %c1_i32 = arith.constant 1 : i32
    %110 = arith.select %109, %c1_i32, %c32_i32 : i32
    %111 = vector.broadcast %110 : i32 to vector<2x128xi32>
    %112 = arith.remsi %108, %111 : vector<2x128xi32>
    %c0_i32_61 = arith.constant 0 : i32
    %113 = vector.broadcast %c0_i32_61 : i32 to vector<2x128xi32>
    %114 = arith.cmpi ne, %112, %113 : vector<2x128xi32>
    %c0_i32_62 = arith.constant 0 : i32
    %115 = vector.broadcast %c0_i32_62 : i32 to vector<2x128xi32>
    %116 = arith.cmpi slt, %112, %115 : vector<2x128xi32>
    %c0_i32_63 = arith.constant 0 : i32
    %117 = arith.cmpi slt, %110, %c0_i32_63 : i32
    %118 = vector.broadcast %117 : i1 to vector<2x128xi1>
    %119 = vector.broadcast %118 : vector<2x128xi1> to vector<2x128xi1>
    %120 = arith.xori %116, %119 : vector<2x128xi1>
    %121 = arith.andi %120, %114 : vector<2x128xi1>
    %122 = vector.broadcast %110 : i32 to vector<2x128xi32>
    %123 = arith.addi %112, %122 : vector<2x128xi32>
    %124 = arith.select %121, %123, %112 : vector<2x128xi1>, vector<2x128xi32>
    %c8_i32 = arith.constant 8 : i32
    %125 = vector.broadcast %c8_i32 : i32 to vector<2x128xi32>
    %126 = arith.cmpi slt, %124, %125 : vector<2x128xi32>
    %c16_i32 = arith.constant 16 : i32
    %127 = vector.broadcast %c16_i32 : i32 to vector<2x128xi32>
    %128 = arith.cmpi slt, %124, %127 : vector<2x128xi32>
    %cst_64 = arith.constant 5.000000e-01 : f32
    %129 = vector.broadcast %cst_64 : f32 to vector<2x128xf32>
    %130 = arith.mulf %129, %107 : vector<2x128xf32>
    %131 = math.exp %130 : vector<2x128xf32>
    %cst_65 = arith.constant 0.000000e+00 : f32
    %132 = vector.broadcast %cst_65 : f32 to vector<2x128xf32>
    %133 = arith.select %128, %131, %132 : vector<2x128xi1>, vector<2x128xf32>
    %134 = arith.select %126, %107, %133 : vector<2x128xi1>, vector<2x128xf32>
    %c8_66 = arith.constant 8 : index
    %c0_67 = arith.constant 0 : index
    %c0_68 = arith.constant 0 : index
    %135 = vector.load %arg3[%c8_66, %c0_67, %c0_68] : memref<11x128x128xf32, #tpu.memory_space<vmem>>, vector<1x128x128xf32>
    %136 = vector.shape_cast %135 : vector<1x128x128xf32> to vector<128x128xf32>
    %cst_69 = arith.constant dense<0.000000e+00> : vector<2x128xf32>
    %137 = tpu.matmul %100, %136, %cst_69 {dimension_numbers = #tpu.dot_dimension_numbers<[1], [0], [0], [1], [0, 0, 1, 1], [], []>} : vector<2x128xf32>, vector<128x128xf32>, vector<2x128xf32> -> vector<2x128xf32>
    %c9 = arith.constant 9 : index
    %c0_70 = arith.constant 0 : index
    %c0_71 = arith.constant 0 : index
    %138 = vector.load %arg4[%c9, %c0_70, %c0_71] : memref<12x1x128xf32, #tpu.memory_space<vmem>>, vector<1x1x128xf32>
    %139 = vector.shape_cast %138 : vector<1x1x128xf32> to vector<1x128xf32>
    %140 = vector.broadcast %139 : vector<1x128xf32> to vector<2x128xf32>
    %141 = arith.addf %137, %140 : vector<2x128xf32>
    %142 = arith.negf %141 : vector<2x128xf32>
    %143 = math.exp %142 : vector<2x128xf32>
    %cst_72 = arith.constant 1.000000e+00 : f32
    %144 = vector.broadcast %cst_72 : f32 to vector<2x128xf32>
    %145 = arith.addf %144, %143 : vector<2x128xf32>
    %146 = arith.divf %144, %145 : vector<2x128xf32>
    %147 = arith.mulf %141, %146 : vector<2x128xf32>
    %c9_73 = arith.constant 9 : index
    %c0_74 = arith.constant 0 : index
    %c0_75 = arith.constant 0 : index
    %148 = vector.load %arg3[%c9_73, %c0_74, %c0_75] : memref<11x128x128xf32, #tpu.memory_space<vmem>>, vector<1x128x128xf32>
    %149 = vector.shape_cast %148 : vector<1x128x128xf32> to vector<128x128xf32>
    %cst_76 = arith.constant dense<0.000000e+00> : vector<2x128xf32>
    %150 = tpu.matmul %147, %149, %cst_76 {dimension_numbers = #tpu.dot_dimension_numbers<[1], [0], [0], [1], [0, 0, 1, 1], [], []>} : vector<2x128xf32>, vector<128x128xf32>, vector<2x128xf32> -> vector<2x128xf32>
    %c10 = arith.constant 10 : index
    %c0_77 = arith.constant 0 : index
    %c0_78 = arith.constant 0 : index
    %151 = vector.load %arg4[%c10, %c0_77, %c0_78] : memref<12x1x128xf32, #tpu.memory_space<vmem>>, vector<1x1x128xf32>
    %152 = vector.shape_cast %151 : vector<1x1x128xf32> to vector<1x128xf32>
    %153 = vector.broadcast %152 : vector<1x128xf32> to vector<2x128xf32>
    %154 = arith.addf %150, %153 : vector<2x128xf32>
    %155 = arith.negf %154 : vector<2x128xf32>
    %156 = math.exp %155 : vector<2x128xf32>
    %cst_79 = arith.constant 1.000000e+00 : f32
    %157 = vector.broadcast %cst_79 : f32 to vector<2x128xf32>
    %158 = arith.addf %157, %156 : vector<2x128xf32>
    %159 = arith.divf %157, %158 : vector<2x128xf32>
    %160 = arith.mulf %154, %159 : vector<2x128xf32>
    %c10_80 = arith.constant 10 : index
    %c0_81 = arith.constant 0 : index
    %c0_82 = arith.constant 0 : index
    %161 = vector.load %arg3[%c10_80, %c0_81, %c0_82] : memref<11x128x128xf32, #tpu.memory_space<vmem>>, vector<1x128x128xf32>
    %162 = vector.shape_cast %161 : vector<1x128x128xf32> to vector<128x128xf32>
    %cst_83 = arith.constant dense<0.000000e+00> : vector<2x128xf32>
    %163 = tpu.matmul %160, %162, %cst_83 {dimension_numbers = #tpu.dot_dimension_numbers<[1], [0], [0], [1], [0, 0, 1, 1], [], []>} : vector<2x128xf32>, vector<128x128xf32>, vector<2x128xf32> -> vector<2x128xf32>
    %c11 = arith.constant 11 : index
    %c0_84 = arith.constant 0 : index
    %c0_85 = arith.constant 0 : index
    %164 = vector.load %arg4[%c11, %c0_84, %c0_85] : memref<12x1x128xf32, #tpu.memory_space<vmem>>, vector<1x1x128xf32>
    %165 = vector.shape_cast %164 : vector<1x1x128xf32> to vector<1x128xf32>
    %166 = vector.broadcast %165 : vector<1x128xf32> to vector<2x128xf32>
    %167 = arith.addf %163, %166 : vector<2x128xf32>
    %168 = arith.addf %134, %167 : vector<2x128xf32>
    %c0_86 = arith.constant 0 : index
    %c0_87 = arith.constant 0 : index
    %169 = vector.load %arg5[%c0_86, %c0_87] : memref<2x128xf32, #tpu.memory_space<vmem>>, vector<2x128xf32>
    tpu.vector_store %arg5[%c0_86, %c0_87], %168 {strides = array<i32>} : memref<2x128xf32, #tpu.memory_space<vmem>>, vector<2x128xf32>,
    return
  }
  func.func @transform_0(%arg0: i32) -> (i32, i32) {
    %c0_i32 = arith.constant 0 : i32
    %c0_i32_0 = arith.constant 0 : i32
    return %arg0, %c0_i32 : i32, i32
  }
  func.func @transform_1(%arg0: i32) -> (i32, i32) {
    %c0_i32 = arith.constant 0 : i32
    %c0_i32_0 = arith.constant 0 : i32
    %c0_i32_1 = arith.constant 0 : i32
    return %c0_i32, %c0_i32_0 : i32, i32
  }
  func.func @transform_2(%arg0: i32) -> (i32, i32, i32) {
    %c0_i32 = arith.constant 0 : i32
    %c0_i32_0 = arith.constant 0 : i32
    %c0_i32_1 = arith.constant 0 : i32
    %c0_i32_2 = arith.constant 0 : i32
    return %c0_i32, %c0_i32_0, %c0_i32_1 : i32, i32, i32
  }
  func.func @transform_3(%arg0: i32) -> (i32, i32, i32) {
    %c0_i32 = arith.constant 0 : i32
    %c0_i32_0 = arith.constant 0 : i32
    %c0_i32_1 = arith.constant 0 : i32
    %c0_i32_2 = arith.constant 0 : i32
    return %c0_i32, %c0_i32_0, %c0_i32_1 : i32, i32, i32
  }
  func.func @transform_4(%arg0: i32) -> (i32, i32) {
    %c0_i32 = arith.constant 0 : i32
    %c0_i32_0 = arith.constant 0 : i32
    return %arg0, %c0_i32 : i32, i32
  }
}

</mosaic_0001>

<llo_original>
// kernel: tpu_custom_call.1
$region0: #{tpu_custom_call.1}
  #allocation0 [shape = 'u32[]', space=smem, size = 0x4, offset = 0x4, fixed_abs, tag = 'smem constant byte address 0x4 - core index']
  #allocation1 [shape = 'u32[144,128]{1,0:T(1,128)}', space=vmem, size = 0x12000, scoped, tag = 'internal scratch']
  %s0 = inlined_call_operand.hbm [shape: f32[2,64], index: 0, kind: input, shape index: {}]
  %s1 = inlined_call_operand.hbm [shape: f32[64,128], index: 1, kind: input, shape index: {}]
  %s2 = inlined_call_operand.hbm [shape: f32[11,128,128], index: 2, kind: input, shape index: {}]
  %s3 = inlined_call_operand.hbm [shape: f32[12,1,128], index: 3, kind: input, shape index: {}]
  %s4 = inlined_call_operand.hbm [shape: f32[2,128], index: 4, kind: output, shape index: {}]
  %s5 = sld [smem:[#allocation0]]
  $region42: #{tpu_custom_call.1} parent=0
    _
  %s7 = ssub.s32 1, %s5
  %s8 = scalar_select 0, %s7, %s5
  $region1: #{tpu_custom_call.1} parent=0
    #allocation2 [shape = 'u8[1024]{0}', space=vmem, size = 0x400, scoped, tag = 'input window, operand 0, single buffered']
    #allocation3 [shape = 's32[1]{0}', space=sflag, size = 0x4, scoped, tag = 'scoped memory for tpu_custom_call.1']
    #allocation4 [shape = 's32[1]{0}', space=sflag, size = 0x4, scoped, tag = 'scoped memory for tpu_custom_call.1']
    #allocation5 [shape = 'u8[32768]{0}', space=vmem, size = 0x8000, scoped, tag = 'input window, operand 1, single buffered']
    #allocation6 [shape = 's32[1]{0}', space=sflag, size = 0x4, scoped, tag = 'scoped memory for tpu_custom_call.1']
    #allocation7 [shape = 'u8[720896]{0}', space=vmem, size = 0xb0000, scoped, tag = 'input window, operand 2, single buffered']
    #allocation8 [shape = 'u8[6144]{0}', space=vmem, size = 0x1800, scoped, tag = 'input window, operand 3, single buffered']
    #allocation9 [shape = 's32[1]{0}', space=sflag, size = 0x4, scoped, tag = 'scoped memory for tpu_custom_call.1']
    #allocation10 [shape = 'u8[1024]{0}', space=vmem, size = 0x400, scoped, tag = 'output window, operand 0, single buffered']
    %9 = vsyncpa [#allocation3], 0
    %10 = vsyncpa [#allocation6], 0
    %11 = vsyncpa [#allocation9], 0
    %12 = vsyncpa [#allocation4], 0
    // Predicated region
    $region2: #{tpu_custom_call.1} parent=1 // pred_check
      _
    $region3: #{tpu_custom_call.1} parent=1 // pred_check_branch
      %14 = sbr.rel (0) target = $region5
    $region4: #{tpu_custom_call.1} parent=1 // pred_region
      %s16 = ssub.s32 32, 32
      %17 = vsyncadd [#allocation3], %s16
      %s19 = sshll.u32 [#allocation2], 4
      %s20 = int_to_ptr.vmem [resolvable:$true] %s19
      %22 = dma.hbm_to_vmem [thread:$0]  %s0, 32, %s20, [#allocation3]
    $region5: #{tpu_custom_call.1} parent=1 // pred_fallthru
      _
    // Predicated region
    $region6: #{tpu_custom_call.1} parent=1 // pred_check
      _
    $region7: #{tpu_custom_call.1} parent=1 // pred_check_branch
      %24 = sbr.rel (0) target = $region9
    $region8: #{tpu_custom_call.1} parent=1 // pred_region
      %s26 = ssub.s32 1024, 1024
      %27 = vsyncadd [#allocation6], %s26
      %s28 = sshll.u32 [#allocation5], 4
      %s29 = int_to_ptr.vmem [resolvable:$true] %s28
      %34 = dma.hbm_to_vmem [thread:$0]  %s1, 1024, %s29, [#allocation6], 128, 128, 8
    $region9: #{tpu_custom_call.1} parent=1 // pred_fallthru
      _
    // Predicated region
    $region10: #{tpu_custom_call.1} parent=1 // pred_check
      _
    $region11: #{tpu_custom_call.1} parent=1 // pred_check_branch
      %36 = sbr.rel (0) target = $region13
    $region12: #{tpu_custom_call.1} parent=1 // pred_region
      %s38 = ssub.s32 22528, 22528
      %39 = vsyncadd [#allocation6], %s38
      %s40 = sshll.u32 [#allocation7], 4
      %s41 = int_to_ptr.vmem [resolvable:$true] %s40
      %46 = dma.hbm_to_vmem [thread:$0]  %s2, 22528, %s41, [#allocation6], 128, 128, 8
    $region13: #{tpu_custom_call.1} parent=1 // pred_fallthru
      _
    // Predicated region
    $region14: #{tpu_custom_call.1} parent=1 // pred_check
      _
    $region15: #{tpu_custom_call.1} parent=1 // pred_check_branch
      %48 = sbr.rel (0) target = $region17
    $region16: #{tpu_custom_call.1} parent=1 // pred_region
      %s50 = ssub.s32 192, 192
      %51 = vsyncadd [#allocation9], %s50
      %s52 = sshll.u32 [#allocation8], 4
      %s53 = int_to_ptr.vmem [resolvable:$true] %s52
      %58 = dma.hbm_to_vmem [thread:$0]  %s3, 192, %s53, [#allocation9], 16, 16, 1
    $region17: #{tpu_custom_call.1} parent=1 // pred_fallthru
      _
    // Predicated region
    $region18: #{tpu_custom_call.1} parent=1 // pred_check
      _
    $region19: #{tpu_custom_call.1} parent=1 // pred_check_branch
      %60 = sbr.rel (0) target = $region21
    $region20: #{tpu_custom_call.1} parent=1 // pred_region
      %61 = dma.done [#allocation3], 32
    $region21: #{tpu_custom_call.1} parent=1 // pred_fallthru
      _
    // Predicated region
    $region22: #{tpu_custom_call.1} parent=1 // pred_check
      _
    $region23: #{tpu_custom_call.1} parent=1 // pred_check_branch
      %63 = sbr.rel (0) target = $region25
    $region24: #{tpu_custom_call.1} parent=1 // pred_region
      %64 = dma.done [#allocation6], 1024
    $region25: #{tpu_custom_call.1} parent=1 // pred_fallthru
      _
    // Predicated region
    $region26: #{tpu_custom_call.1} parent=1 // pred_check
      _
    $region27: #{tpu_custom_call.1} parent=1 // pred_check_branch
      %66 = sbr.rel (0) target = $region29
    $region28: #{tpu_custom_call.1} parent=1 // pred_region
      %67 = dma.done [#allocation6], 22528
    $region29: #{tpu_custom_call.1} parent=1 // pred_fallthru
      _
    // Predicated region
    $region30: #{tpu_custom_call.1} parent=1 // pred_check
      _
    $region31: #{tpu_custom_call.1} parent=1 // pred_check_branch
      %69 = sbr.rel (0) target = $region33
    $region32: #{tpu_custom_call.1} parent=1 // pred_region
      %70 = dma.done [#allocation9], 192
    $region33: #{tpu_custom_call.1} parent=1 // pred_fallthru
      _
    %v71 = vld [vmem:[#allocation2] sm:$0x3]
    %v72 = vld [vmem:[#allocation5] sm:$0xff]
    %v73 = vld [vmem:[#allocation5 + $0x8] sm:$0xff]
    %v74 = vld [vmem:[#allocation5 + $0x10] sm:$0xff]
    %v75 = vld [vmem:[#allocation5 + $0x18] sm:$0xff]
    %v76 = vld [vmem:[#allocation5 + $0x20] sm:$0xff]
    %v77 = vld [vmem:[#allocation5 + $0x28] sm:$0xff]
    %v78 = vld [vmem:[#allocation5 + $0x30] sm:$0xff]
    %v79 = vld [vmem:[#allocation5 + $0x38] sm:$0xff]
    %v80 = vld [vmem:[#allocation8] sm:$0x1]
    %v82 = vlaneseq
    %v83 = vshrl.u32 %v82, 7
    %v84 = vsub.s32 0, %v83
    %v85 = vrot.slane %v80, %v84
    %vm87 = vcmask 523264
    %v89 = vsel %vm87, %v71, 0
    %91 = vmatprep.subr.mxu0 0.0
    %92 = vmatpush1.msra.mxu0 0.0
    %93 = vmatprep.subr.mxu0 0.0
    %94 = vmatpush1.msra.mxu0 0.0
    %95 = vmatprep.subr.mxu0 0.0
    %96 = vmatpush1.msra.mxu0 0.0
    %97 = vmatprep.subr.mxu0 0.0
    %98 = vmatpush1.msra.mxu0 0.0
    %99 = vmatprep.subr.mxu0 0.0
    %100 = vmatpush1.msra.mxu0 0.0
    %101 = vmatprep.subr.mxu0 0.0
    %102 = vmatpush1.msra.mxu0 0.0
    %103 = vmatprep.subr.mxu0 0.0
    %104 = vmatpush1.msra.mxu0 0.0
    %105 = vmatprep.subr.mxu0 0.0
    %106 = vmatpush1.msra.mxu0 0.0
    %107 = vmatprep.subr.mxu0 0.0
    %108 = vmatpush1.msra.mxu0 %v79
    %109 = vmatprep.subr.mxu0 0.0
    %110 = vmatpush1.msra.mxu0 %v78
    %111 = vmatprep.subr.mxu0 0.0
    %112 = vmatpush1.msra.mxu0 %v77
    %113 = vmatprep.subr.mxu0 0.0
    %114 = vmatpush1.msra.mxu0 %v76
    %115 = vmatprep.subr.mxu0 0.0
    %116 = vmatpush1.msra.mxu0 %v75
    %117 = vmatprep.subr.mxu0 0.0
    %118 = vmatpush1.msra.mxu0 %v74
    %119 = vmatprep.subr.mxu0 0.0
    %120 = vmatpush1.msra.mxu0 %v73
    %121 = vmatprep.subr.mxu0 0.0
    %122 = vmatpush1.msra.mxu0 %v72
    %123 = vmatprep.subr.mxu0 0.0
    %124 = vmatpush2.msra.mxu0 0.0
    %125 = vmatprep.subr.mxu0 0.0
    %126 = vmatpush2.msra.mxu0 0.0
    %127 = vmatprep.subr.mxu0 0.0
    %128 = vmatpush2.msra.mxu0 0.0
    %129 = vmatprep.subr.mxu0 0.0
    %130 = vmatpush2.msra.mxu0 0.0
    %131 = vmatprep.subr.mxu0 0.0
    %132 = vmatpush2.msra.mxu0 0.0
    %133 = vmatprep.subr.mxu0 0.0
    %134 = vmatpush2.msra.mxu0 0.0
    %135 = vmatprep.subr.mxu0 0.0
    %136 = vmatpush2.msra.mxu0 0.0
    %137 = vmatprep.subr.mxu0 0.0
    %138 = vmatpush2.msra.mxu0 0.0
    %139 = vmatprep.subr.mxu0 0.0
    %140 = vmatpush2.msra.mxu0 0.0
    %141 = vmatprep.subr.mxu0 0.0
    %142 = vmatpush2.msra.mxu0 0.0
    %143 = vmatprep.subr.mxu0 0.0
    %144 = vmatpush2.msra.mxu0 0.0
    %145 = vmatprep.subr.mxu0 0.0
    %146 = vmatpush2.msra.mxu0 0.0
    %147 = vmatprep.subr.mxu0 0.0
    %148 = vmatpush2.msra.mxu0 0.0
    %149 = vmatprep.subr.mxu0 0.0
    %150 = vmatpush2.msra.mxu0 0.0
    %151 = vmatprep.subr.mxu0 0.0
    %152 = vmatpush2.msra.mxu0 0.0
    %153 = vmatprep.subr.mxu0 0.0
    %154 = vmatpush2.msra.mxu0 0.0
    %155 = vmatprep.mubr.f32.mxu0 0.0
    %156 = vmatmul.mubr.f32.gmra.mxu0 %v89
    %v157 = vpop.f32.mrf.mxu0
    %v158 = vadd.f32 %v85, %v157
    %v159 = vpop.f32.mrf.mxu0
    %160 = vdwg.mxu0
    %v161 = vxor.u32 %v158, 2147483648
    %v162 = vmul.f32 %v161, 1.442695
    %v163 = vpow.pop %v162
    %v164 = vadd.f32 %v163, 1.0
    %v165 = vrcp.pop %v164
    %v166 = vmul.f32 1.0, %v165
    %v167 = vmul.f32 %v158, %v166
    %v168 = vld [vmem:[#allocation7] sm:$0xff]
    %v169 = vld [vmem:[#allocation7 + $0x8] sm:$0xff]
    %v170 = vld [vmem:[#allocation7 + $0x10] sm:$0xff]
    %v171 = vld [vmem:[#allocation7 + $0x18] sm:$0xff]
    %v172 = vld [vmem:[#allocation7 + $0x20] sm:$0xff]
    %v173 = vld [vmem:[#allocation7 + $0x28] sm:$0xff]
    %v174 = vld [vmem:[#allocation7 + $0x30] sm:$0xff]
    %v175 = vld [vmem:[#allocation7 + $0x38] sm:$0xff]
    %v176 = vld [vmem:[#allocation7 + $0x40] sm:$0xff]
    %v177 = vld [vmem:[#allocation7 + $0x48] sm:$0xff]
    %v178 = vld [vmem:[#allocation7 + $0x50] sm:$0xff]
    %v179 = vld [vmem:[#allocation7 + $0x58] sm:$0xff]
    %v180 = vld [vmem:[#allocation7 + $0x60] sm:$0xff]
    %v181 = vld [vmem:[#allocation7 + $0x68] sm:$0xff]
    %v182 = vld [vmem:[#allocation7 + $0x70] sm:$0xff]
    %v183 = vld [vmem:[#allocation7 + $0x78] sm:$0xff]
    %s184 = scalar_lea.vmem [#allocation8], 1
    %v185 = vld [vmem:[%s184] sm:$0x1]
    %v187 = vlaneseq
    %v188 = vshrl.u32 %v187, 7
    %v189 = vsub.s32 0, %v188
    %v190 = vrot.slane %v185, %v189
    %192 = vmatprep.subr.mxu0 0.0
    %193 = vmatpush1.msra.mxu0 %v183
    %194 = vmatprep.subr.mxu0 0.0
    %195 = vmatpush1.msra.mxu0 %v182
    %196 = vmatprep.subr.mxu0 0.0
    %197 = vmatpush1.msra.mxu0 %v181
    %198 = vmatprep.subr.mxu0 0.0
    %199 = vmatpush1.msra.mxu0 %v180
    %200 = vmatprep.subr.mxu0 0.0
    %201 = vmatpush1.msra.mxu0 %v179
    %202 = vmatprep.subr.mxu0 0.0
    %203 = vmatpush1.msra.mxu0 %v178
    %204 = vmatprep.subr.mxu0 0.0
    %205 = vmatpush1.msra.mxu0 %v177
    %206 = vmatprep.subr.mxu0 0.0
    %207 = vmatpush1.msra.mxu0 %v176
    %208 = vmatprep.subr.mxu0 0.0
    %209 = vmatpush1.msra.mxu0 %v175
    %210 = vmatprep.subr.mxu0 0.0
    %211 = vmatpush1.msra.mxu0 %v174
    %212 = vmatprep.subr.mxu0 0.0
    %213 = vmatpush1.msra.mxu0 %v173
    %214 = vmatprep.subr.mxu0 0.0
    %215 = vmatpush1.msra.mxu0 %v172
    %216 = vmatprep.subr.mxu0 0.0
    %217 = vmatpush1.msra.mxu0 %v171
    %218 = vmatprep.subr.mxu0 0.0
    %219 = vmatpush1.msra.mxu0 %v170
    %220 = vmatprep.subr.mxu0 0.0
    %221 = vmatpush1.msra.mxu0 %v169
    %222 = vmatprep.subr.mxu0 0.0
    %223 = vmatpush1.msra.mxu0 %v168
    %224 = vmatprep.subr.mxu0 0.0
    %225 = vmatpush2.msra.mxu0 0.0
    %226 = vmatprep.subr.mxu0 0.0
    %227 = vmatpush2.msra.mxu0 0.0
    %228 = vmatprep.subr.mxu0 0.0
    %229 = vmatpush2.msra.mxu0 0.0
    %230 = vmatprep.subr.mxu0 0.0
    %231 = vmatpush2.msra.mxu0 0.0
    %232 = vmatprep.subr.mxu0 0.0
    %233 = vmatpush2.msra.mxu0 0.0
    %234 = vmatprep.subr.mxu0 0.0
    %235 = vmatpush2.msra.mxu0 0.0
    %236 = vmatprep.subr.mxu0 0.0
    %237 = vmatpush2.msra.mxu0 0.0
    %238 = vmatprep.subr.mxu0 0.0
    %239 = vmatpush2.msra.mxu0 0.0
    %240 = vmatprep.subr.mxu0 0.0
    %241 = vmatpush2.msra.mxu0 0.0
    %242 = vmatprep.subr.mxu0 0.0
    %243 = vmatpush2.msra.mxu0 0.0
    %244 = vmatprep.subr.mxu0 0.0
    %245 = vmatpush2.msra.mxu0 0.0
    %246 = vmatprep.subr.mxu0 0.0
    %247 = vmatpush2.msra.mxu0 0.0
    %248 = vmatprep.subr.mxu0 0.0
    %249 = vmatpush2.msra.mxu0 0.0
    %250 = vmatprep.subr.mxu0 0.0
    %251 = vmatpush2.msra.mxu0 0.0
    %252 = vmatprep.subr.mxu0 0.0
    %253 = vmatpush2.msra.mxu0 0.0
    %254 = vmatprep.subr.mxu0 0.0
    %255 = vmatpush2.msra.mxu0 0.0
    %256 = vmatprep.mubr.f32.mxu0 0.0
    %257 = vmatmul.mubr.f32.gmra.mxu0 %v167
    %v258 = vpop.f32.mrf.mxu0
    %v259 = vadd.f32 %v190, %v258
    %v260 = vpop.f32.mrf.mxu0
    %261 = vdwg.mxu0
    %v262 = vxor.u32 %v259, 2147483648
    %v263 = vmul.f32 %v262, 1.442695
    %v264 = vpow.pop %v263
    %v265 = vadd.f32 %v264, 1.0
    %v266 = vrcp.pop %v265
    %v267 = vmul.f32 1.0, %v266
    %v268 = vmul.f32 %v259, %v267
    %s269 = scalar_lea.vmem [#allocation7], 128
    %v270 = vld [vmem:[%s269] sm:$0xff]
    %v271 = vld [vmem:[%s269 + $0x8] sm:$0xff]
    %v272 = vld [vmem:[%s269 + $0x10] sm:$0xff]
    %v273 = vld [vmem:[%s269 + $0x18] sm:$0xff]
    %v274 = vld [vmem:[%s269 + $0x20] sm:$0xff]
    %v275 = vld [vmem:[%s269 + $0x28] sm:$0xff]
    %v276 = vld [vmem:[%s269 + $0x30] sm:$0xff]
    %v277 = vld [vmem:[%s269 + $0x38] sm:$0xff]
    %v278 = vld [vmem:[%s269 + $0x40] sm:$0xff]
    %v279 = vld [vmem:[%s269 + $0x48] sm:$0xff]
    %v280 = vld [vmem:[%s269 + $0x50] sm:$0xff]
    %v281 = vld [vmem:[%s269 + $0x58] sm:$0xff]
    %v282 = vld [vmem:[%s269 + $0x60] sm:$0xff]
    %v283 = vld [vmem:[%s269 + $0x68] sm:$0xff]
    %v284 = vld [vmem:[%s269 + $0x70] sm:$0xff]
    %v285 = vld [vmem:[%s269 + $0x78] sm:$0xff]
    %s286 = scalar_lea.vmem [#allocation8], 2
    %v287 = vld [vmem:[%s286] sm:$0x1]
    %v289 = vlaneseq
    %v290 = vshrl.u32 %v289, 7
    %v291 = vsub.s32 0, %v290
    %v292 = vrot.slane %v287, %v291
    %294 = vmatprep.subr.mxu0 0.0
    %295 = vmatpush1.msra.mxu0 %v285
    %296 = vmatprep.subr.mxu0 0.0
    %297 = vmatpush1.msra.mxu0 %v284
    %298 = vmatprep.subr.mxu0 0.0
    %299 = vmatpush1.msra.mxu0 %v283
    %300 = vmatprep.subr.mxu0 0.0
    %301 = vmatpush1.msra.mxu0 %v282
    %302 = vmatprep.subr.mxu0 0.0
    %303 = vmatpush1.msra.mxu0 %v281
    %304 = vmatprep.subr.mxu0 0.0
    %305 = vmatpush1.msra.mxu0 %v280
    %306 = vmatprep.subr.mxu0 0.0
    %307 = vmatpush1.msra.mxu0 %v279
    %308 = vmatprep.subr.mxu0 0.0
    %309 = vmatpush1.msra.mxu0 %v278
    %310 = vmatprep.subr.mxu0 0.0
    %311 = vmatpush1.msra.mxu0 %v277
    %312 = vmatprep.subr.mxu0 0.0
    %313 = vmatpush1.msra.mxu0 %v276
    %314 = vmatprep.subr.mxu0 0.0
    %315 = vmatpush1.msra.mxu0 %v275
    %316 = vmatprep.subr.mxu0 0.0
    %317 = vmatpush1.msra.mxu0 %v274
    %318 = vmatprep.subr.mxu0 0.0
    %319 = vmatpush1.msra.mxu0 %v273
    %320 = vmatprep.subr.mxu0 0.0
    %321 = vmatpush1.msra.mxu0 %v272
    %322 = vmatprep.subr.mxu0 0.0
    %323 = vmatpush1.msra.mxu0 %v271
    %324 = vmatprep.subr.mxu0 0.0
    %325 = vmatpush1.msra.mxu0 %v270
    %326 = vmatprep.subr.mxu0 0.0
    %327 = vmatpush2.msra.mxu0 0.0
    %328 = vmatprep.subr.mxu0 0.0
    %329 = vmatpush2.msra.mxu0 0.0
    %330 = vmatprep.subr.mxu0 0.0
    %331 = vmatpush2.msra.mxu0 0.0
    %332 = vmatprep.subr.mxu0 0.0
    %333 = vmatpush2.msra.mxu0 0.0
    %334 = vmatprep.subr.mxu0 0.0
    %335 = vmatpush2.msra.mxu0 0.0
    %336 = vmatprep.subr.mxu0 0.0
    %337 = vmatpush2.msra.mxu0 0.0
    %338 = vmatprep.subr.mxu0 0.0
    %339 = vmatpush2.msra.mxu0 0.0
    %340 = vmatprep.subr.mxu0 0.0
    %341 = vmatpush2.msra.mxu0 0.0
    %342 = vmatprep.subr.mxu0 0.0
    %343 = vmatpush2.msra.mxu0 0.0
    %344 = vmatprep.subr.mxu0 0.0
    %345 = vmatpush2.msra.mxu0 0.0
    %346 = vmatprep.subr.mxu0 0.0
    %347 = vmatpush2.msra.mxu0 0.0
    %348 = vmatprep.subr.mxu0 0.0
    %349 = vmatpush2.msra.mxu0 0.0
    %350 = vmatprep.subr.mxu0 0.0
    %351 = vmatpush2.msra.mxu0 0.0
    %352 = vmatprep.subr.mxu0 0.0
    %353 = vmatpush2.msra.mxu0 0.0
    %354 = vmatprep.subr.mxu0 0.0
    %355 = vmatpush2.msra.mxu0 0.0
    %356 = vmatprep.subr.mxu0 0.0
    %357 = vmatpush2.msra.mxu0 0.0
    %358 = vmatprep.mubr.f32.mxu0 0.0
    %359 = vmatmul.mubr.f32.gmra.mxu0 %v268
    %v360 = vpop.f32.mrf.mxu0
    %v361 = vadd.f32 %v292, %v360
    %v362 = vpop.f32.mrf.mxu0
    %363 = vdwg.mxu0
    %v364 = vadd.f32 %v167, %v361
    %v365 = vxor.u32 %v364, 2147483648
    %v366 = vmul.f32 %v365, 1.442695
    %v367 = vpow.pop %v366
    %v368 = vadd.f32 %v367, 1.0
    %v369 = vrcp.pop %v368
    %v370 = vmul.f32 1.0, %v369
    %v371 = vmul.f32 %v364, %v370
    %s372 = scalar_lea.vmem [#allocation7], 256
    %v373 = vld [vmem:[%s372] sm:$0xff]
    %v374 = vld [vmem:[%s372 + $0x8] sm:$0xff]
    %v375 = vld [vmem:[%s372 + $0x10] sm:$0xff]
    %v376 = vld [vmem:[%s372 + $0x18] sm:$0xff]
    %v377 = vld [vmem:[%s372 + $0x20] sm:$0xff]
    %v378 = vld [vmem:[%s372 + $0x28] sm:$0xff]
    %v379 = vld [vmem:[%s372 + $0x30] sm:$0xff]
    %v380 = vld [vmem:[%s372 + $0x38] sm:$0xff]
    %v381 = vld [vmem:[%s372 + $0x40] sm:$0xff]
    %v382 = vld [vmem:[%s372 + $0x48] sm:$0xff]
    %v383 = vld [vmem:[%s372 + $0x50] sm:$0xff]
    %v384 = vld [vmem:[%s372 + $0x58] sm:$0xff]
    %v385 = vld [vmem:[%s372 + $0x60] sm:$0xff]
    %v386 = vld [vmem:[%s372 + $0x68] sm:$0xff]
    %v387 = vld [vmem:[%s372 + $0x70] sm:$0xff]
    %v388 = vld [vmem:[%s372 + $0x78] sm:$0xff]
    %s389 = scalar_lea.vmem [#allocation8], 3
    %v390 = vld [vmem:[%s389] sm:$0x1]
    %v392 = vlaneseq
    %v393 = vshrl.u32 %v392, 7
    %v394 = vsub.s32 0, %v393
    %v395 = vrot.slane %v390, %v394
    %397 = vmatprep.subr.mxu0 0.0
    %398 = vmatpush1.msra.mxu0 %v388
    %399 = vmatprep.subr.mxu0 0.0
    %400 = vmatpush1.msra.mxu0 %v387
    %401 = vmatprep.subr.mxu0 0.0
    %402 = vmatpush1.msra.mxu0 %v386
    %403 = vmatprep.subr.mxu0 0.0
    %404 = vmatpush1.msra.mxu0 %v385
    %405 = vmatprep.subr.mxu0 0.0
    %406 = vmatpush1.msra.mxu0 %v384
    %407 = vmatprep.subr.mxu0 0.0
    %408 = vmatpush1.msra.mxu0 %v383
    %409 = vmatprep.subr.mxu0 0.0
    %410 = vmatpush1.msra.mxu0 %v382
    %411 = vmatprep.subr.mxu0 0.0
    %412 = vmatpush1.msra.mxu0 %v381
    %413 = vmatprep.subr.mxu0 0.0
    %414 = vmatpush1.msra.mxu0 %v380
    %415 = vmatprep.subr.mxu0 0.0
    %416 = vmatpush1.msra.mxu0 %v379
    %417 = vmatprep.subr.mxu0 0.0
    %418 = vmatpush1.msra.mxu0 %v378
    %419 = vmatprep.subr.mxu0 0.0
    %420 = vmatpush1.msra.mxu0 %v377
    %421 = vmatprep.subr.mxu0 0.0
    %422 = vmatpush1.msra.mxu0 %v376
    %423 = vmatprep.subr.mxu0 0.0
    %424 = vmatpush1.msra.mxu0 %v375
    %425 = vmatprep.subr.mxu0 0.0
    %426 = vmatpush1.msra.mxu0 %v374
    %427 = vmatprep.subr.mxu0 0.0
    %428 = vmatpush1.msra.mxu0 %v373
    %429 = vmatprep.subr.mxu0 0.0
    %430 = vmatpush2.msra.mxu0 0.0
    %431 = vmatprep.subr.mxu0 0.0
    %432 = vmatpush2.msra.mxu0 0.0
    %433 = vmatprep.subr.mxu0 0.0
    %434 = vmatpush2.msra.mxu0 0.0
    %435 = vmatprep.subr.mxu0 0.0
    %436 = vmatpush2.msra.mxu0 0.0
    %437 = vmatprep.subr.mxu0 0.0
    %438 = vmatpush2.msra.mxu0 0.0
    %439 = vmatprep.subr.mxu0 0.0
    %440 = vmatpush2.msra.mxu0 0.0
    %441 = vmatprep.subr.mxu0 0.0
    %442 = vmatpush2.msra.mxu0 0.0
    %443 = vmatprep.subr.mxu0 0.0
    %444 = vmatpush2.msra.mxu0 0.0
    %445 = vmatprep.subr.mxu0 0.0
    %446 = vmatpush2.msra.mxu0 0.0
    %447 = vmatprep.subr.mxu0 0.0
    %448 = vmatpush2.msra.mxu0 0.0
    %449 = vmatprep.subr.mxu0 0.0
    %450 = vmatpush2.msra.mxu0 0.0
    %451 = vmatprep.subr.mxu0 0.0
    %452 = vmatpush2.msra.mxu0 0.0
    %453 = vmatprep.subr.mxu0 0.0
    %454 = vmatpush2.msra.mxu0 0.0
    %455 = vmatprep.subr.mxu0 0.0
    %456 = vmatpush2.msra.mxu0 0.0
    %457 = vmatprep.subr.mxu0 0.0
    %458 = vmatpush2.msra.mxu0 0.0
    %459 = vmatprep.subr.mxu0 0.0
    %460 = vmatpush2.msra.mxu0 0.0
    %461 = vmatprep.mubr.f32.mxu0 0.0
    %462 = vmatmul.mubr.f32.gmra.mxu0 %v371
    %v463 = vpop.f32.mrf.mxu0
    %v464 = vadd.f32 %v395, %v463
    %v465 = vpop.f32.mrf.mxu0
    %466 = vdwg.mxu0
    %v467 = vxor.u32 %v464, 2147483648
    %v468 = vmul.f32 %v467, 1.442695
    %v469 = vpow.pop %v468
    %v470 = vadd.f32 %v469, 1.0
    %v471 = vrcp.pop %v470
    %v472 = vmul.f32 1.0, %v471
    %v473 = vmul.f32 %v464, %v472
    %s474 = scalar_lea.vmem [#allocation7], 384
    %v475 = vld [vmem:[%s474] sm:$0xff]
    %v476 = vld [vmem:[%s474 + $0x8] sm:$0xff]
    %v477 = vld [vmem:[%s474 + $0x10] sm:$0xff]
    %v478 = vld [vmem:[%s474 + $0x18] sm:$0xff]
    %v479 = vld [vmem:[%s474 + $0x20] sm:$0xff]
    %v480 = vld [vmem:[%s474 + $0x28] sm:$0xff]
    %v481 = vld [vmem:[%s474 + $0x30] sm:$0xff]
    %v482 = vld [vmem:[%s474 + $0x38] sm:$0xff]
    %v483 = vld [vmem:[%s474 + $0x40] sm:$0xff]
    %v484 = vld [vmem:[%s474 + $0x48] sm:$0xff]
    %v485 = vld [vmem:[%s474 + $0x50] sm:$0xff]
    %v486 = vld [vmem:[%s474 + $0x58] sm:$0xff]
    %v487 = vld [vmem:[%s474 + $0x60] sm:$0xff]
    %v488 = vld [vmem:[%s474 + $0x68] sm:$0xff]
    %v489 = vld [vmem:[%s474 + $0x70] sm:$0xff]
    %v490 = vld [vmem:[%s474 + $0x78] sm:$0xff]
    %s491 = scalar_lea.vmem [#allocation8], 4
    %v492 = vld [vmem:[%s491] sm:$0x1]
    %v494 = vlaneseq
    %v495 = vshrl.u32 %v494, 7
    %v496 = vsub.s32 0, %v495
    %v497 = vrot.slane %v492, %v496
    %499 = vmatprep.subr.mxu0 0.0
    %500 = vmatpush1.msra.mxu0 %v490
    %501 = vmatprep.subr.mxu0 0.0
    %502 = vmatpush1.msra.mxu0 %v489
    %503 = vmatprep.subr.mxu0 0.0
    %504 = vmatpush1.msra.mxu0 %v488
    %505 = vmatprep.subr.mxu0 0.0
    %506 = vmatpush1.msra.mxu0 %v487
    %507 = vmatprep.subr.mxu0 0.0
    %508 = vmatpush1.msra.mxu0 %v486
    %509 = vmatprep.subr.mxu0 0.0
    %510 = vmatpush1.msra.mxu0 %v485
    %511 = vmatprep.subr.mxu0 0.0
    %512 = vmatpush1.msra.mxu0 %v484
    %513 = vmatprep.subr.mxu0 0.0
    %514 = vmatpush1.msra.mxu0 %v483
    %515 = vmatprep.subr.mxu0 0.0
    %516 = vmatpush1.msra.mxu0 %v482
    %517 = vmatprep.subr.mxu0 0.0
    %518 = vmatpush1.msra.mxu0 %v481
    %519 = vmatprep.subr.mxu0 0.0
    %520 = vmatpush1.msra.mxu0 %v480
    %521 = vmatprep.subr.mxu0 0.0
    %522 = vmatpush1.msra.mxu0 %v479
    %523 = vmatprep.subr.mxu0 0.0
    %524 = vmatpush1.msra.mxu0 %v478
    %525 = vmatprep.subr.mxu0 0.0
    %526 = vmatpush1.msra.mxu0 %v477
    %527 = vmatprep.subr.mxu0 0.0
    %528 = vmatpush1.msra.mxu0 %v476
    %529 = vmatprep.subr.mxu0 0.0
    %530 = vmatpush1.msra.mxu0 %v475
    %531 = vmatprep.subr.mxu0 0.0
    %532 = vmatpush2.msra.mxu0 0.0
    %533 = vmatprep.subr.mxu0 0.0
    %534 = vmatpush2.msra.mxu0 0.0
    %535 = vmatprep.subr.mxu0 0.0
    %536 = vmatpush2.msra.mxu0 0.0
    %537 = vmatprep.subr.mxu0 0.0
    %538 = vmatpush2.msra.mxu0 0.0
    %539 = vmatprep.subr.mxu0 0.0
    %540 = vmatpush2.msra.mxu0 0.0
    %541 = vmatprep.subr.mxu0 0.0
    %542 = vmatpush2.msra.mxu0 0.0
    %543 = vmatprep.subr.mxu0 0.0
    %544 = vmatpush2.msra.mxu0 0.0
    %545 = vmatprep.subr.mxu0 0.0
    %546 = vmatpush2.msra.mxu0 0.0
    %547 = vmatprep.subr.mxu0 0.0
    %548 = vmatpush2.msra.mxu0 0.0
    %549 = vmatprep.subr.mxu0 0.0
    %550 = vmatpush2.msra.mxu0 0.0
    %551 = vmatprep.subr.mxu0 0.0
    %552 = vmatpush2.msra.mxu0 0.0
    %553 = vmatprep.subr.mxu0 0.0
    %554 = vmatpush2.msra.mxu0 0.0
    %555 = vmatprep.subr.mxu0 0.0
    %556 = vmatpush2.msra.mxu0 0.0
    %557 = vmatprep.subr.mxu0 0.0
    %558 = vmatpush2.msra.mxu0 0.0
    %559 = vmatprep.subr.mxu0 0.0
    %560 = vmatpush2.msra.mxu0 0.0
    %561 = vmatprep.subr.mxu0 0.0
    %562 = vmatpush2.msra.mxu0 0.0
    %563 = vmatprep.mubr.f32.mxu0 0.0
    %564 = vmatmul.mubr.f32.gmra.mxu0 %v473
    %v565 = vpop.f32.mrf.mxu0
    %v566 = vadd.f32 %v497, %v565
    %v567 = vpop.f32.mrf.mxu0
    %568 = vdwg.mxu0
    %v569 = vadd.f32 %v371, %v566
    %v570 = vxor.u32 %v569, 2147483648
    %v571 = vmul.f32 %v570, 1.442695
    %v572 = vpow.pop %v571
    %v573 = vadd.f32 %v572, 1.0
    %v574 = vrcp.pop %v573
    %v575 = vmul.f32 1.0, %v574
    %v576 = vmul.f32 %v569, %v575
    %s577 = scalar_lea.vmem [#allocation7], 512
    %v578 = vld [vmem:[%s577] sm:$0xff]
    %v579 = vld [vmem:[%s577 + $0x8] sm:$0xff]
    %v580 = vld [vmem:[%s577 + $0x10] sm:$0xff]
    %v581 = vld [vmem:[%s577 + $0x18] sm:$0xff]
    %v582 = vld [vmem:[%s577 + $0x20] sm:$0xff]
    %v583 = vld [vmem:[%s577 + $0x28] sm:$0xff]
    %v584 = vld [vmem:[%s577 + $0x30] sm:$0xff]
    %v585 = vld [vmem:[%s577 + $0x38] sm:$0xff]
    %v586 = vld [vmem:[%s577 + $0x40] sm:$0xff]
    %v587 = vld [vmem:[%s577 + $0x48] sm:$0xff]
    %v588 = vld [vmem:[%s577 + $0x50] sm:$0xff]
    %v589 = vld [vmem:[%s577 + $0x58] sm:$0xff]
    %v590 = vld [vmem:[%s577 + $0x60] sm:$0xff]
    %v591 = vld [vmem:[%s577 + $0x68] sm:$0xff]
    %v592 = vld [vmem:[%s577 + $0x70] sm:$0xff]
    %v593 = vld [vmem:[%s577 + $0x78] sm:$0xff]
    %s594 = scalar_lea.vmem [#allocation8], 5
    %v595 = vld [vmem:[%s594] sm:$0x1]
    %v597 = vlaneseq
    %v598 = vshrl.u32 %v597, 7
    %v599 = vsub.s32 0, %v598
    %v600 = vrot.slane %v595, %v599
    %602 = vmatprep.subr.mxu0 0.0
    %603 = vmatpush1.msra.mxu0 %v593
    %604 = vmatprep.subr.mxu0 0.0
    %605 = vmatpush1.msra.mxu0 %v592
    %606 = vmatprep.subr.mxu0 0.0
    %607 = vmatpush1.msra.mxu0 %v591
    %608 = vmatprep.subr.mxu0 0.0
    %609 = vmatpush1.msra.mxu0 %v590
    %610 = vmatprep.subr.mxu0 0.0
    %611 = vmatpush1.msra.mxu0 %v589
    %612 = vmatprep.subr.mxu0 0.0
    %613 = vmatpush1.msra.mxu0 %v588
    %614 = vmatprep.subr.mxu0 0.0
    %615 = vmatpush1.msra.mxu0 %v587
    %616 = vmatprep.subr.mxu0 0.0
    %617 = vmatpush1.msra.mxu0 %v586
    %618 = vmatprep.subr.mxu0 0.0
    %619 = vmatpush1.msra.mxu0 %v585
    %620 = vmatprep.subr.mxu0 0.0
    %621 = vmatpush1.msra.mxu0 %v584
    %622 = vmatprep.subr.mxu0 0.0
    %623 = vmatpush1.msra.mxu0 %v583
    %624 = vmatprep.subr.mxu0 0.0
    %625 = vmatpush1.msra.mxu0 %v582
    %626 = vmatprep.subr.mxu0 0.0
    %627 = vmatpush1.msra.mxu0 %v581
    %628 = vmatprep.subr.mxu0 0.0
    %629 = vmatpush1.msra.mxu0 %v580
    %630 = vmatprep.subr.mxu0 0.0
    %631 = vmatpush1.msra.mxu0 %v579
    %632 = vmatprep.subr.mxu0 0.0
    %633 = vmatpush1.msra.mxu0 %v578
    %634 = vmatprep.subr.mxu0 0.0
    %635 = vmatpush2.msra.mxu0 0.0
    %636 = vmatprep.subr.mxu0 0.0
    %637 = vmatpush2.msra.mxu0 0.0
    %638 = vmatprep.subr.mxu0 0.0
    %639 = vmatpush2.msra.mxu0 0.0
    %640 = vmatprep.subr.mxu0 0.0
    %641 = vmatpush2.msra.mxu0 0.0
    %642 = vmatprep.subr.mxu0 0.0
    %643 = vmatpush2.msra.mxu0 0.0
    %644 = vmatprep.subr.mxu0 0.0
    %645 = vmatpush2.msra.mxu0 0.0
    %646 = vmatprep.subr.mxu0 0.0
    %647 = vmatpush2.msra.mxu0 0.0
    %648 = vmatprep.subr.mxu0 0.0
    %649 = vmatpush2.msra.mxu0 0.0
    %650 = vmatprep.subr.mxu0 0.0
    %651 = vmatpush2.msra.mxu0 0.0
    %652 = vmatprep.subr.mxu0 0.0
    %653 = vmatpush2.msra.mxu0 0.0
    %654 = vmatprep.subr.mxu0 0.0
    %655 = vmatpush2.msra.mxu0 0.0
    %656 = vmatprep.subr.mxu0 0.0
    %657 = vmatpush2.msra.mxu0 0.0
    %658 = vmatprep.subr.mxu0 0.0
    %659 = vmatpush2.msra.mxu0 0.0
    %660 = vmatprep.subr.mxu0 0.0
    %661 = vmatpush2.msra.mxu0 0.0
    %662 = vmatprep.subr.mxu0 0.0
    %663 = vmatpush2.msra.mxu0 0.0
    %664 = vmatprep.subr.mxu0 0.0
    %665 = vmatpush2.msra.mxu0 0.0
    %666 = vmatprep.mubr.f32.mxu0 0.0
    %667 = vmatmul.mubr.f32.gmra.mxu0 %v576
    %v668 = vpop.f32.mrf.mxu0
    %v669 = vadd.f32 %v600, %v668
    %v670 = vpop.f32.mrf.mxu0
    %671 = vdwg.mxu0
    %v672 = vxor.u32 %v669, 2147483648
    %v673 = vmul.f32 %v672, 1.442695
    %v674 = vpow.pop %v673
    %v675 = vadd.f32 %v674, 1.0
    %v676 = vrcp.pop %v675
    %v677 = vmul.f32 1.0, %v676
    %v678 = vmul.f32 %v669, %v677
    %s679 = scalar_lea.vmem [#allocation7], 640
    %v680 = vld [vmem:[%s679] sm:$0xff]
    %v681 = vld [vmem:[%s679 + $0x8] sm:$0xff]
    %v682 = vld [vmem:[%s679 + $0x10] sm:$0xff]
    %v683 = vld [vmem:[%s679 + $0x18] sm:$0xff]
    %v684 = vld [vmem:[%s679 + $0x20] sm:$0xff]
    %v685 = vld [vmem:[%s679 + $0x28] sm:$0xff]
    %v686 = vld [vmem:[%s679 + $0x30] sm:$0xff]
    %v687 = vld [vmem:[%s679 + $0x38] sm:$0xff]
    %v688 = vld [vmem:[%s679 + $0x40] sm:$0xff]
    %v689 = vld [vmem:[%s679 + $0x48] sm:$0xff]
    %v690 = vld [vmem:[%s679 + $0x50] sm:$0xff]
    %v691 = vld [vmem:[%s679 + $0x58] sm:$0xff]
    %v692 = vld [vmem:[%s679 + $0x60] sm:$0xff]
    %v693 = vld [vmem:[%s679 + $0x68] sm:$0xff]
    %v694 = vld [vmem:[%s679 + $0x70] sm:$0xff]
    %v695 = vld [vmem:[%s679 + $0x78] sm:$0xff]
    %s696 = scalar_lea.vmem [#allocation8], 6
    %v697 = vld [vmem:[%s696] sm:$0x1]
    %v699 = vlaneseq
    %v700 = vshrl.u32 %v699, 7
    %v701 = vsub.s32 0, %v700
    %v702 = vrot.slane %v697, %v701
    %704 = vmatprep.subr.mxu0 0.0
    %705 = vmatpush1.msra.mxu0 %v695
    %706 = vmatprep.subr.mxu0 0.0
    %707 = vmatpush1.msra.mxu0 %v694
    %708 = vmatprep.subr.mxu0 0.0
    %709 = vmatpush1.msra.mxu0 %v693
    %710 = vmatprep.subr.mxu0 0.0
    %711 = vmatpush1.msra.mxu0 %v692
    %712 = vmatprep.subr.mxu0 0.0
    %713 = vmatpush1.msra.mxu0 %v691
    %714 = vmatprep.subr.mxu0 0.0
    %715 = vmatpush1.msra.mxu0 %v690
    %716 = vmatprep.subr.mxu0 0.0
    %717 = vmatpush1.msra.mxu0 %v689
    %718 = vmatprep.subr.mxu0 0.0
    %719 = vmatpush1.msra.mxu0 %v688
    %720 = vmatprep.subr.mxu0 0.0
    %721 = vmatpush1.msra.mxu0 %v687
    %722 = vmatprep.subr.mxu0 0.0
    %723 = vmatpush1.msra.mxu0 %v686
    %724 = vmatprep.subr.mxu0 0.0
    %725 = vmatpush1.msra.mxu0 %v685
    %726 = vmatprep.subr.mxu0 0.0
    %727 = vmatpush1.msra.mxu0 %v684
    %728 = vmatprep.subr.mxu0 0.0
    %729 = vmatpush1.msra.mxu0 %v683
    %730 = vmatprep.subr.mxu0 0.0
    %731 = vmatpush1.msra.mxu0 %v682
    %732 = vmatprep.subr.mxu0 0.0
    %733 = vmatpush1.msra.mxu0 %v681
    %734 = vmatprep.subr.mxu0 0.0
    %735 = vmatpush1.msra.mxu0 %v680
    %736 = vmatprep.subr.mxu0 0.0
    %737 = vmatpush2.msra.mxu0 0.0
    %738 = vmatprep.subr.mxu0 0.0
    %739 = vmatpush2.msra.mxu0 0.0
    %740 = vmatprep.subr.mxu0 0.0
    %741 = vmatpush2.msra.mxu0 0.0
    %742 = vmatprep.subr.mxu0 0.0
    %743 = vmatpush2.msra.mxu0 0.0
    %744 = vmatprep.subr.mxu0 0.0
    %745 = vmatpush2.msra.mxu0 0.0
    %746 = vmatprep.subr.mxu0 0.0
    %747 = vmatpush2.msra.mxu0 0.0
    %748 = vmatprep.subr.mxu0 0.0
    %749 = vmatpush2.msra.mxu0 0.0
    %750 = vmatprep.subr.mxu0 0.0
    %751 = vmatpush2.msra.mxu0 0.0
    %752 = vmatprep.subr.mxu0 0.0
    %753 = vmatpush2.msra.mxu0 0.0
    %754 = vmatprep.subr.mxu0 0.0
    %755 = vmatpush2.msra.mxu0 0.0
    %756 = vmatprep.subr.mxu0 0.0
    %757 = vmatpush2.msra.mxu0 0.0
    %758 = vmatprep.subr.mxu0 0.0
    %759 = vmatpush2.msra.mxu0 0.0
    %760 = vmatprep.subr.mxu0 0.0
    %761 = vmatpush2.msra.mxu0 0.0
    %762 = vmatprep.subr.mxu0 0.0
    %763 = vmatpush2.msra.mxu0 0.0
    %764 = vmatprep.subr.mxu0 0.0
    %765 = vmatpush2.msra.mxu0 0.0
    %766 = vmatprep.subr.mxu0 0.0
    %767 = vmatpush2.msra.mxu0 0.0
    %768 = vmatprep.mubr.f32.mxu0 0.0
    %769 = vmatmul.mubr.f32.gmra.mxu0 %v678
    %v770 = vpop.f32.mrf.mxu0
    %v771 = vadd.f32 %v702, %v770
    %v772 = vpop.f32.mrf.mxu0
    %773 = vdwg.mxu0
    %v774 = vadd.f32 %v576, %v771
    %v775 = vxor.u32 %v774, 2147483648
    %v776 = vmul.f32 %v775, 1.442695
    %v777 = vpow.pop %v776
    %v778 = vadd.f32 %v777, 1.0
    %v779 = vrcp.pop %v778
    %v780 = vmul.f32 1.0, %v779
    %v781 = vmul.f32 %v774, %v780
    %s782 = scalar_lea.vmem [#allocation7], 768
    %v783 = vld [vmem:[%s782] sm:$0xff]
    %v784 = vld [vmem:[%s782 + $0x8] sm:$0xff]
    %v785 = vld [vmem:[%s782 + $0x10] sm:$0xff]
    %v786 = vld [vmem:[%s782 + $0x18] sm:$0xff]
    %v787 = vld [vmem:[%s782 + $0x20] sm:$0xff]
    %v788 = vld [vmem:[%s782 + $0x28] sm:$0xff]
    %v789 = vld [vmem:[%s782 + $0x30] sm:$0xff]
    %v790 = vld [vmem:[%s782 + $0x38] sm:$0xff]
    %v791 = vld [vmem:[%s782 + $0x40] sm:$0xff]
    %v792 = vld [vmem:[%s782 + $0x48] sm:$0xff]
    %v793 = vld [vmem:[%s782 + $0x50] sm:$0xff]
    %v794 = vld [vmem:[%s782 + $0x58] sm:$0xff]
    %v795 = vld [vmem:[%s782 + $0x60] sm:$0xff]
    %v796 = vld [vmem:[%s782 + $0x68] sm:$0xff]
    %v797 = vld [vmem:[%s782 + $0x70] sm:$0xff]
    %v798 = vld [vmem:[%s782 + $0x78] sm:$0xff]
    %s799 = scalar_lea.vmem [#allocation8], 7
    %v800 = vld [vmem:[%s799] sm:$0x1]
    %v802 = vlaneseq
    %v803 = vshrl.u32 %v802, 7
    %v804 = vsub.s32 0, %v803
    %v805 = vrot.slane %v800, %v804
    %807 = vmatprep.subr.mxu0 0.0
    %808 = vmatpush1.msra.mxu0 %v798
    %809 = vmatprep.subr.mxu0 0.0
    %810 = vmatpush1.msra.mxu0 %v797
    %811 = vmatprep.subr.mxu0 0.0
    %812 = vmatpush1.msra.mxu0 %v796
    %813 = vmatprep.subr.mxu0 0.0
    %814 = vmatpush1.msra.mxu0 %v795
    %815 = vmatprep.subr.mxu0 0.0
    %816 = vmatpush1.msra.mxu0 %v794
    %817 = vmatprep.subr.mxu0 0.0
    %818 = vmatpush1.msra.mxu0 %v793
    %819 = vmatprep.subr.mxu0 0.0
    %820 = vmatpush1.msra.mxu0 %v792
    %821 = vmatprep.subr.mxu0 0.0
    %822 = vmatpush1.msra.mxu0 %v791
    %823 = vmatprep.subr.mxu0 0.0
    %824 = vmatpush1.msra.mxu0 %v790
    %825 = vmatprep.subr.mxu0 0.0
    %826 = vmatpush1.msra.mxu0 %v789
    %827 = vmatprep.subr.mxu0 0.0
    %828 = vmatpush1.msra.mxu0 %v788
    %829 = vmatprep.subr.mxu0 0.0
    %830 = vmatpush1.msra.mxu0 %v787
    %831 = vmatprep.subr.mxu0 0.0
    %832 = vmatpush1.msra.mxu0 %v786
    %833 = vmatprep.subr.mxu0 0.0
    %834 = vmatpush1.msra.mxu0 %v785
    %835 = vmatprep.subr.mxu0 0.0
    %836 = vmatpush1.msra.mxu0 %v784
    %837 = vmatprep.subr.mxu0 0.0
    %838 = vmatpush1.msra.mxu0 %v783
    %839 = vmatprep.subr.mxu0 0.0
    %840 = vmatpush2.msra.mxu0 0.0
    %841 = vmatprep.subr.mxu0 0.0
    %842 = vmatpush2.msra.mxu0 0.0
    %843 = vmatprep.subr.mxu0 0.0
    %844 = vmatpush2.msra.mxu0 0.0
    %845 = vmatprep.subr.mxu0 0.0
    %846 = vmatpush2.msra.mxu0 0.0
    %847 = vmatprep.subr.mxu0 0.0
    %848 = vmatpush2.msra.mxu0 0.0
    %849 = vmatprep.subr.mxu0 0.0
    %850 = vmatpush2.msra.mxu0 0.0
    %851 = vmatprep.subr.mxu0 0.0
    %852 = vmatpush2.msra.mxu0 0.0
    %853 = vmatprep.subr.mxu0 0.0
    %854 = vmatpush2.msra.mxu0 0.0
    %855 = vmatprep.subr.mxu0 0.0
    %856 = vmatpush2.msra.mxu0 0.0
    %857 = vmatprep.subr.mxu0 0.0
    %858 = vmatpush2.msra.mxu0 0.0
    %859 = vmatprep.subr.mxu0 0.0
    %860 = vmatpush2.msra.mxu0 0.0
    %861 = vmatprep.subr.mxu0 0.0
    %862 = vmatpush2.msra.mxu0 0.0
    %863 = vmatprep.subr.mxu0 0.0
    %864 = vmatpush2.msra.mxu0 0.0
    %865 = vmatprep.subr.mxu0 0.0
    %866 = vmatpush2.msra.mxu0 0.0
    %867 = vmatprep.subr.mxu0 0.0
    %868 = vmatpush2.msra.mxu0 0.0
    %869 = vmatprep.subr.mxu0 0.0
    %870 = vmatpush2.msra.mxu0 0.0
    %871 = vmatprep.mubr.f32.mxu0 0.0
    %872 = vmatmul.mubr.f32.gmra.mxu0 %v781
    %v873 = vpop.f32.mrf.mxu0
    %v874 = vadd.f32 %v805, %v873
    %v875 = vpop.f32.mrf.mxu0
    %876 = vdwg.mxu0
    %s877 = scalar_lea.vmem [#allocation7], 896
    %v878 = vld [vmem:[%s877] sm:$0xff]
    %v879 = vld [vmem:[%s877 + $0x8] sm:$0xff]
    %v880 = vld [vmem:[%s877 + $0x10] sm:$0xff]
    %v881 = vld [vmem:[%s877 + $0x18] sm:$0xff]
    %v882 = vld [vmem:[%s877 + $0x20] sm:$0xff]
    %v883 = vld [vmem:[%s877 + $0x28] sm:$0xff]
    %v884 = vld [vmem:[%s877 + $0x30] sm:$0xff]
    %v885 = vld [vmem:[%s877 + $0x38] sm:$0xff]
    %v886 = vld [vmem:[%s877 + $0x40] sm:$0xff]
    %v887 = vld [vmem:[%s877 + $0x48] sm:$0xff]
    %v888 = vld [vmem:[%s877 + $0x50] sm:$0xff]
    %v889 = vld [vmem:[%s877 + $0x58] sm:$0xff]
    %v890 = vld [vmem:[%s877 + $0x60] sm:$0xff]
    %v891 = vld [vmem:[%s877 + $0x68] sm:$0xff]
    %v892 = vld [vmem:[%s877 + $0x70] sm:$0xff]
    %v893 = vld [vmem:[%s877 + $0x78] sm:$0xff]
    %s894 = scalar_lea.vmem [#allocation8], 8
    %v895 = vld [vmem:[%s894] sm:$0x1]
    %v897 = vlaneseq
    %v898 = vshrl.u32 %v897, 7
    %v899 = vsub.s32 0, %v898
    %v900 = vrot.slane %v895, %v899
    %902 = vmatprep.subr.mxu0 0.0
    %903 = vmatpush1.msra.mxu0 %v893
    %904 = vmatprep.subr.mxu0 0.0
    %905 = vmatpush1.msra.mxu0 %v892
    %906 = vmatprep.subr.mxu0 0.0
    %907 = vmatpush1.msra.mxu0 %v891
    %908 = vmatprep.subr.mxu0 0.0
    %909 = vmatpush1.msra.mxu0 %v890
    %910 = vmatprep.subr.mxu0 0.0
    %911 = vmatpush1.msra.mxu0 %v889
    %912 = vmatprep.subr.mxu0 0.0
    %913 = vmatpush1.msra.mxu0 %v888
    %914 = vmatprep.subr.mxu0 0.0
    %915 = vmatpush1.msra.mxu0 %v887
    %916 = vmatprep.subr.mxu0 0.0
    %917 = vmatpush1.msra.mxu0 %v886
    %918 = vmatprep.subr.mxu0 0.0
    %919 = vmatpush1.msra.mxu0 %v885
    %920 = vmatprep.subr.mxu0 0.0
    %921 = vmatpush1.msra.mxu0 %v884
    %922 = vmatprep.subr.mxu0 0.0
    %923 = vmatpush1.msra.mxu0 %v883
    %924 = vmatprep.subr.mxu0 0.0
    %925 = vmatpush1.msra.mxu0 %v882
    %926 = vmatprep.subr.mxu0 0.0
    %927 = vmatpush1.msra.mxu0 %v881
    %928 = vmatprep.subr.mxu0 0.0
    %929 = vmatpush1.msra.mxu0 %v880
    %930 = vmatprep.subr.mxu0 0.0
    %931 = vmatpush1.msra.mxu0 %v879
    %932 = vmatprep.subr.mxu0 0.0
    %933 = vmatpush1.msra.mxu0 %v878
    %934 = vmatprep.subr.mxu0 0.0
    %935 = vmatpush2.msra.mxu0 0.0
    %936 = vmatprep.subr.mxu0 0.0
    %937 = vmatpush2.msra.mxu0 0.0
    %938 = vmatprep.subr.mxu0 0.0
    %939 = vmatpush2.msra.mxu0 0.0
    %940 = vmatprep.subr.mxu0 0.0
    %941 = vmatpush2.msra.mxu0 0.0
    %942 = vmatprep.subr.mxu0 0.0
    %943 = vmatpush2.msra.mxu0 0.0
    %944 = vmatprep.subr.mxu0 0.0
    %945 = vmatpush2.msra.mxu0 0.0
    %946 = vmatprep.subr.mxu0 0.0
    %947 = vmatpush2.msra.mxu0 0.0
    %948 = vmatprep.subr.mxu0 0.0
    %949 = vmatpush2.msra.mxu0 0.0
    %950 = vmatprep.subr.mxu0 0.0
    %951 = vmatpush2.msra.mxu0 0.0
    %952 = vmatprep.subr.mxu0 0.0
    %953 = vmatpush2.msra.mxu0 0.0
    %954 = vmatprep.subr.mxu0 0.0
    %955 = vmatpush2.msra.mxu0 0.0
    %956 = vmatprep.subr.mxu0 0.0
    %957 = vmatpush2.msra.mxu0 0.0
    %958 = vmatprep.subr.mxu0 0.0
    %959 = vmatpush2.msra.mxu0 0.0
    %960 = vmatprep.subr.mxu0 0.0
    %961 = vmatpush2.msra.mxu0 0.0
    %962 = vmatprep.subr.mxu0 0.0
    %963 = vmatpush2.msra.mxu0 0.0
    %964 = vmatprep.subr.mxu0 0.0
    %965 = vmatpush2.msra.mxu0 0.0
    %966 = vmatprep.mubr.f32.mxu0 0.0
    %967 = vmatmul.mubr.f32.gmra.mxu0 %v874
    %v968 = vpop.f32.mrf.mxu0
    %v969 = vadd.f32 %v900, %v968
    %v970 = vpop.f32.mrf.mxu0
    %971 = vdwg.mxu0
    %v972 = vlaneseq
    %v973 = vand.u32 %v972, 127
    %vm974 = vcmp.lt.s32.totalorder %v973, 0
    %v975 = vsub.s32 0, %v973
    %v976 = vsel %vm974, %v975, %v973
    %v977 = vshrl.u32 %v976, 5
    %v978 = vand.u32 %v976, 31
    %v979 = vsub.s32 0, %v978
    %v980 = vsel %vm974, %v979, %v978
    %vm981 = vcmp.ne.s32.totalorder %v980, 0
    %vm982 = vcmp.lt.s32.totalorder %v980, 0
    %vm983 = vmand %vm982, %vm981
    %v984 = vadd.s32 %v980, 32
    %v985 = vsel %vm983, %v984, %v980
    %vm986 = vcmp.lt.s32.totalorder %v985, 8
    %vm987 = vcmp.lt.s32.totalorder %v985, 16
    %v988 = vmul.f32 %v969, 0.5
    %v989 = vmul.f32 %v988, 1.442695
    %v990 = vpow.pop %v989
    %v991 = vsel %vm987, %v990, 0.0
    %v992 = vsel %vm986, %v969, %v991
    %s993 = scalar_lea.vmem [#allocation7], 1024
    %v994 = vld [vmem:[%s993] sm:$0xff]
    %v995 = vld [vmem:[%s993 + $0x8] sm:$0xff]
    %v996 = vld [vmem:[%s993 + $0x10] sm:$0xff]
    %v997 = vld [vmem:[%s993 + $0x18] sm:$0xff]
    %v998 = vld [vmem:[%s993 + $0x20] sm:$0xff]
    %v999 = vld [vmem:[%s993 + $0x28] sm:$0xff]
    %v1000 = vld [vmem:[%s993 + $0x30] sm:$0xff]
    %v1001 = vld [vmem:[%s993 + $0x38] sm:$0xff]
    %v1002 = vld [vmem:[%s993 + $0x40] sm:$0xff]
    %v1003 = vld [vmem:[%s993 + $0x48] sm:$0xff]
    %v1004 = vld [vmem:[%s993 + $0x50] sm:$0xff]
    %v1005 = vld [vmem:[%s993 + $0x58] sm:$0xff]
    %v1006 = vld [vmem:[%s993 + $0x60] sm:$0xff]
    %v1007 = vld [vmem:[%s993 + $0x68] sm:$0xff]
    %v1008 = vld [vmem:[%s993 + $0x70] sm:$0xff]
    %v1009 = vld [vmem:[%s993 + $0x78] sm:$0xff]
    %s1010 = scalar_lea.vmem [#allocation8], 9
    %v1011 = vld [vmem:[%s1010] sm:$0x1]
    %v1013 = vlaneseq
    %v1014 = vshrl.u32 %v1013, 7
    %v1015 = vsub.s32 0, %v1014
    %v1016 = vrot.slane %v1011, %v1015
    %1018 = vmatprep.subr.mxu0 0.0
    %1019 = vmatpush1.msra.mxu0 %v1009
    %1020 = vmatprep.subr.mxu0 0.0
    %1021 = vmatpush1.msra.mxu0 %v1008
    %1022 = vmatprep.subr.mxu0 0.0
    %1023 = vmatpush1.msra.mxu0 %v1007
    %1024 = vmatprep.subr.mxu0 0.0
    %1025 = vmatpush1.msra.mxu0 %v1006
    %1026 = vmatprep.subr.mxu0 0.0
    %1027 = vmatpush1.msra.mxu0 %v1005
    %1028 = vmatprep.subr.mxu0 0.0
    %1029 = vmatpush1.msra.mxu0 %v1004
    %1030 = vmatprep.subr.mxu0 0.0
    %1031 = vmatpush1.msra.mxu0 %v1003
    %1032 = vmatprep.subr.mxu0 0.0
    %1033 = vmatpush1.msra.mxu0 %v1002
    %1034 = vmatprep.subr.mxu0 0.0
    %1035 = vmatpush1.msra.mxu0 %v1001
    %1036 = vmatprep.subr.mxu0 0.0
    %1037 = vmatpush1.msra.mxu0 %v1000
    %1038 = vmatprep.subr.mxu0 0.0
    %1039 = vmatpush1.msra.mxu0 %v999
    %1040 = vmatprep.subr.mxu0 0.0
    %1041 = vmatpush1.msra.mxu0 %v998
    %1042 = vmatprep.subr.mxu0 0.0
    %1043 = vmatpush1.msra.mxu0 %v997
    %1044 = vmatprep.subr.mxu0 0.0
    %1045 = vmatpush1.msra.mxu0 %v996
    %1046 = vmatprep.subr.mxu0 0.0
    %1047 = vmatpush1.msra.mxu0 %v995
    %1048 = vmatprep.subr.mxu0 0.0
    %1049 = vmatpush1.msra.mxu0 %v994
    %1050 = vmatprep.subr.mxu0 0.0
    %1051 = vmatpush2.msra.mxu0 0.0
    %1052 = vmatprep.subr.mxu0 0.0
    %1053 = vmatpush2.msra.mxu0 0.0
    %1054 = vmatprep.subr.mxu0 0.0
    %1055 = vmatpush2.msra.mxu0 0.0
    %1056 = vmatprep.subr.mxu0 0.0
    %1057 = vmatpush2.msra.mxu0 0.0
    %1058 = vmatprep.subr.mxu0 0.0
    %1059 = vmatpush2.msra.mxu0 0.0
    %1060 = vmatprep.subr.mxu0 0.0
    %1061 = vmatpush2.msra.mxu0 0.0
    %1062 = vmatprep.subr.mxu0 0.0
    %1063 = vmatpush2.msra.mxu0 0.0
    %1064 = vmatprep.subr.mxu0 0.0
    %1065 = vmatpush2.msra.mxu0 0.0
    %1066 = vmatprep.subr.mxu0 0.0
    %1067 = vmatpush2.msra.mxu0 0.0
    %1068 = vmatprep.subr.mxu0 0.0
    %1069 = vmatpush2.msra.mxu0 0.0
    %1070 = vmatprep.subr.mxu0 0.0
    %1071 = vmatpush2.msra.mxu0 0.0
    %1072 = vmatprep.subr.mxu0 0.0
    %1073 = vmatpush2.msra.mxu0 0.0
    %1074 = vmatprep.subr.mxu0 0.0
    %1075 = vmatpush2.msra.mxu0 0.0
    %1076 = vmatprep.subr.mxu0 0.0
    %1077 = vmatpush2.msra.mxu0 0.0
    %1078 = vmatprep.subr.mxu0 0.0
    %1079 = vmatpush2.msra.mxu0 0.0
    %1080 = vmatprep.subr.mxu0 0.0
    %1081 = vmatpush2.msra.mxu0 0.0
    %1082 = vmatprep.mubr.f32.mxu0 0.0
    %1083 = vmatmul.mubr.f32.gmra.mxu0 %v874
    %v1084 = vpop.f32.mrf.mxu0
    %v1085 = vadd.f32 %v1016, %v1084
    %v1086 = vpop.f32.mrf.mxu0
    %1087 = vdwg.mxu0
    %v1088 = vxor.u32 %v1085, 2147483648
    %v1089 = vmul.f32 %v1088, 1.442695
    %v1090 = vpow.pop %v1089
    %v1091 = vadd.f32 %v1090, 1.0
    %v1092 = vrcp.pop %v1091
    %v1093 = vmul.f32 1.0, %v1092
    %v1094 = vmul.f32 %v1085, %v1093
    %s1095 = scalar_lea.vmem [#allocation7], 1152
    %v1096 = vld [vmem:[%s1095] sm:$0xff]
    %v1097 = vld [vmem:[%s1095 + $0x8] sm:$0xff]
    %v1098 = vld [vmem:[%s1095 + $0x10] sm:$0xff]
    %v1099 = vld [vmem:[%s1095 + $0x18] sm:$0xff]
    %v1100 = vld [vmem:[%s1095 + $0x20] sm:$0xff]
    %v1101 = vld [vmem:[%s1095 + $0x28] sm:$0xff]
    %v1102 = vld [vmem:[%s1095 + $0x30] sm:$0xff]
    %v1103 = vld [vmem:[%s1095 + $0x38] sm:$0xff]
    %v1104 = vld [vmem:[%s1095 + $0x40] sm:$0xff]
    %v1105 = vld [vmem:[%s1095 + $0x48] sm:$0xff]
    %v1106 = vld [vmem:[%s1095 + $0x50] sm:$0xff]
    %v1107 = vld [vmem:[%s1095 + $0x58] sm:$0xff]
    %v1108 = vld [vmem:[%s1095 + $0x60] sm:$0xff]
    %v1109 = vld [vmem:[%s1095 + $0x68] sm:$0xff]
    %v1110 = vld [vmem:[%s1095 + $0x70] sm:$0xff]
    %v1111 = vld [vmem:[%s1095 + $0x78] sm:$0xff]
    %s1112 = scalar_lea.vmem [#allocation8], 10
    %v1113 = vld [vmem:[%s1112] sm:$0x1]
    %v1115 = vlaneseq
    %v1116 = vshrl.u32 %v1115, 7
    %v1117 = vsub.s32 0, %v1116
    %v1118 = vrot.slane %v1113, %v1117
    %1120 = vmatprep.subr.mxu0 0.0
    %1121 = vmatpush1.msra.mxu0 %v1111
    %1122 = vmatprep.subr.mxu0 0.0
    %1123 = vmatpush1.msra.mxu0 %v1110
    %1124 = vmatprep.subr.mxu0 0.0
    %1125 = vmatpush1.msra.mxu0 %v1109
    %1126 = vmatprep.subr.mxu0 0.0
    %1127 = vmatpush1.msra.mxu0 %v1108
    %1128 = vmatprep.subr.mxu0 0.0
    %1129 = vmatpush1.msra.mxu0 %v1107
    %1130 = vmatprep.subr.mxu0 0.0
    %1131 = vmatpush1.msra.mxu0 %v1106
    %1132 = vmatprep.subr.mxu0 0.0
    %1133 = vmatpush1.msra.mxu0 %v1105
    %1134 = vmatprep.subr.mxu0 0.0
    %1135 = vmatpush1.msra.mxu0 %v1104
    %1136 = vmatprep.subr.mxu0 0.0
    %1137 = vmatpush1.msra.mxu0 %v1103
    %1138 = vmatprep.subr.mxu0 0.0
    %1139 = vmatpush1.msra.mxu0 %v1102
    %1140 = vmatprep.subr.mxu0 0.0
    %1141 = vmatpush1.msra.mxu0 %v1101
    %1142 = vmatprep.subr.mxu0 0.0
    %1143 = vmatpush1.msra.mxu0 %v1100
    %1144 = vmatprep.subr.mxu0 0.0
    %1145 = vmatpush1.msra.mxu0 %v1099
    %1146 = vmatprep.subr.mxu0 0.0
    %1147 = vmatpush1.msra.mxu0 %v1098
    %1148 = vmatprep.subr.mxu0 0.0
    %1149 = vmatpush1.msra.mxu0 %v1097
    %1150 = vmatprep.subr.mxu0 0.0
    %1151 = vmatpush1.msra.mxu0 %v1096
    %1152 = vmatprep.subr.mxu0 0.0
    %1153 = vmatpush2.msra.mxu0 0.0
    %1154 = vmatprep.subr.mxu0 0.0
    %1155 = vmatpush2.msra.mxu0 0.0
    %1156 = vmatprep.subr.mxu0 0.0
    %1157 = vmatpush2.msra.mxu0 0.0
    %1158 = vmatprep.subr.mxu0 0.0
    %1159 = vmatpush2.msra.mxu0 0.0
    %1160 = vmatprep.subr.mxu0 0.0
    %1161 = vmatpush2.msra.mxu0 0.0
    %1162 = vmatprep.subr.mxu0 0.0
    %1163 = vmatpush2.msra.mxu0 0.0
    %1164 = vmatprep.subr.mxu0 0.0
    %1165 = vmatpush2.msra.mxu0 0.0
    %1166 = vmatprep.subr.mxu0 0.0
    %1167 = vmatpush2.msra.mxu0 0.0
    %1168 = vmatprep.subr.mxu0 0.0
    %1169 = vmatpush2.msra.mxu0 0.0
    %1170 = vmatprep.subr.mxu0 0.0
    %1171 = vmatpush2.msra.mxu0 0.0
    %1172 = vmatprep.subr.mxu0 0.0
    %1173 = vmatpush2.msra.mxu0 0.0
    %1174 = vmatprep.subr.mxu0 0.0
    %1175 = vmatpush2.msra.mxu0 0.0
    %1176 = vmatprep.subr.mxu0 0.0
    %1177 = vmatpush2.msra.mxu0 0.0
    %1178 = vmatprep.subr.mxu0 0.0
    %1179 = vmatpush2.msra.mxu0 0.0
    %1180 = vmatprep.subr.mxu0 0.0
    %1181 = vmatpush2.msra.mxu0 0.0
    %1182 = vmatprep.subr.mxu0 0.0
    %1183 = vmatpush2.msra.mxu0 0.0
    %1184 = vmatprep.mubr.f32.mxu0 0.0
    %1185 = vmatmul.mubr.f32.gmra.mxu0 %v1094
    %v1186 = vpop.f32.mrf.mxu0
    %v1187 = vadd.f32 %v1118, %v1186
    %v1188 = vpop.f32.mrf.mxu0
    %1189 = vdwg.mxu0
    %v1190 = vxor.u32 %v1187, 2147483648
    %v1191 = vmul.f32 %v1190, 1.442695
    %v1192 = vpow.pop %v1191
    %v1193 = vadd.f32 %v1192, 1.0
    %v1194 = vrcp.pop %v1193
    %v1195 = vmul.f32 1.0, %v1194
    %v1196 = vmul.f32 %v1187, %v1195
    %s1197 = scalar_lea.vmem [#allocation7], 1280
    %v1198 = vld [vmem:[%s1197] sm:$0xff]
    %v1199 = vld [vmem:[%s1197 + $0x8] sm:$0xff]
    %v1200 = vld [vmem:[%s1197 + $0x10] sm:$0xff]
    %v1201 = vld [vmem:[%s1197 + $0x18] sm:$0xff]
    %v1202 = vld [vmem:[%s1197 + $0x20] sm:$0xff]
    %v1203 = vld [vmem:[%s1197 + $0x28] sm:$0xff]
    %v1204 = vld [vmem:[%s1197 + $0x30] sm:$0xff]
    %v1205 = vld [vmem:[%s1197 + $0x38] sm:$0xff]
    %v1206 = vld [vmem:[%s1197 + $0x40] sm:$0xff]
    %v1207 = vld [vmem:[%s1197 + $0x48] sm:$0xff]
    %v1208 = vld [vmem:[%s1197 + $0x50] sm:$0xff]
    %v1209 = vld [vmem:[%s1197 + $0x58] sm:$0xff]
    %v1210 = vld [vmem:[%s1197 + $0x60] sm:$0xff]
    %v1211 = vld [vmem:[%s1197 + $0x68] sm:$0xff]
    %v1212 = vld [vmem:[%s1197 + $0x70] sm:$0xff]
    %v1213 = vld [vmem:[%s1197 + $0x78] sm:$0xff]
    %s1214 = scalar_lea.vmem [#allocation8], 11
    %v1215 = vld [vmem:[%s1214] sm:$0x1]
    %v1217 = vlaneseq
    %v1218 = vshrl.u32 %v1217, 7
    %v1219 = vsub.s32 0, %v1218
    %v1220 = vrot.slane %v1215, %v1219
    %1222 = vmatprep.subr.mxu0 0.0
    %1223 = vmatpush1.msra.mxu0 %v1213
    %1224 = vmatprep.subr.mxu0 0.0
    %1225 = vmatpush1.msra.mxu0 %v1212
    %1226 = vmatprep.subr.mxu0 0.0
    %1227 = vmatpush1.msra.mxu0 %v1211
    %1228 = vmatprep.subr.mxu0 0.0
    %1229 = vmatpush1.msra.mxu0 %v1210
    %1230 = vmatprep.subr.mxu0 0.0
    %1231 = vmatpush1.msra.mxu0 %v1209
    %1232 = vmatprep.subr.mxu0 0.0
    %1233 = vmatpush1.msra.mxu0 %v1208
    %1234 = vmatprep.subr.mxu0 0.0
    %1235 = vmatpush1.msra.mxu0 %v1207
    %1236 = vmatprep.subr.mxu0 0.0
    %1237 = vmatpush1.msra.mxu0 %v1206
    %1238 = vmatprep.subr.mxu0 0.0
    %1239 = vmatpush1.msra.mxu0 %v1205
    %1240 = vmatprep.subr.mxu0 0.0
    %1241 = vmatpush1.msra.mxu0 %v1204
    %1242 = vmatprep.subr.mxu0 0.0
    %1243 = vmatpush1.msra.mxu0 %v1203
    %1244 = vmatprep.subr.mxu0 0.0
    %1245 = vmatpush1.msra.mxu0 %v1202
    %1246 = vmatprep.subr.mxu0 0.0
    %1247 = vmatpush1.msra.mxu0 %v1201
    %1248 = vmatprep.subr.mxu0 0.0
    %1249 = vmatpush1.msra.mxu0 %v1200
    %1250 = vmatprep.subr.mxu0 0.0
    %1251 = vmatpush1.msra.mxu0 %v1199
    %1252 = vmatprep.subr.mxu0 0.0
    %1253 = vmatpush1.msra.mxu0 %v1198
    %1254 = vmatprep.subr.mxu0 0.0
    %1255 = vmatpush2.msra.mxu0 0.0
    %1256 = vmatprep.subr.mxu0 0.0
    %1257 = vmatpush2.msra.mxu0 0.0
    %1258 = vmatprep.subr.mxu0 0.0
    %1259 = vmatpush2.msra.mxu0 0.0
    %1260 = vmatprep.subr.mxu0 0.0
    %1261 = vmatpush2.msra.mxu0 0.0
    %1262 = vmatprep.subr.mxu0 0.0
    %1263 = vmatpush2.msra.mxu0 0.0
    %1264 = vmatprep.subr.mxu0 0.0
    %1265 = vmatpush2.msra.mxu0 0.0
    %1266 = vmatprep.subr.mxu0 0.0
    %1267 = vmatpush2.msra.mxu0 0.0
    %1268 = vmatprep.subr.mxu0 0.0
    %1269 = vmatpush2.msra.mxu0 0.0
    %1270 = vmatprep.subr.mxu0 0.0
    %1271 = vmatpush2.msra.mxu0 0.0
    %1272 = vmatprep.subr.mxu0 0.0
    %1273 = vmatpush2.msra.mxu0 0.0
    %1274 = vmatprep.subr.mxu0 0.0
    %1275 = vmatpush2.msra.mxu0 0.0
    %1276 = vmatprep.subr.mxu0 0.0
    %1277 = vmatpush2.msra.mxu0 0.0
    %1278 = vmatprep.subr.mxu0 0.0
    %1279 = vmatpush2.msra.mxu0 0.0
    %1280 = vmatprep.subr.mxu0 0.0
    %1281 = vmatpush2.msra.mxu0 0.0
    %1282 = vmatprep.subr.mxu0 0.0
    %1283 = vmatpush2.msra.mxu0 0.0
    %1284 = vmatprep.subr.mxu0 0.0
    %1285 = vmatpush2.msra.mxu0 0.0
    %1286 = vmatprep.mubr.f32.mxu0 0.0
    %1287 = vmatmul.mubr.f32.gmra.mxu0 %v1196
    %v1288 = vpop.f32.mrf.mxu0
    %v1289 = vadd.f32 %v1220, %v1288
    %v1290 = vpop.f32.mrf.mxu0
    %1291 = vdwg.mxu0
    %v1292 = vadd.f32 %v992, %v1289
    %1293 = vst [vmem:[#allocation10] sm:$0x3] %v1292
    // Predicated region
    $region34: #{tpu_custom_call.1} parent=1 // pred_check
      _
    $region35: #{tpu_custom_call.1} parent=1 // pred_check_branch
      %1295 = sbr.rel (0) target = $region37
    $region36: #{tpu_custom_call.1} parent=1 // pred_region
      %s1297 = ssub.s32 32, 32
      %1298 = vsyncadd [#allocation4], %s1297
      %s1300 = sshll.u32 [#allocation10], 4
      %s1301 = int_to_ptr.vmem [resolvable:$true] %s1300
      %1303 = dma.vmem_to_hbm [thread:$0]  %s1301, 32, %s4, [#allocation4]
    $region37: #{tpu_custom_call.1} parent=1 // pred_fallthru
      _
    // Predicated region
    $region38: #{tpu_custom_call.1} parent=1 // pred_check
      _
    $region39: #{tpu_custom_call.1} parent=1 // pred_check_branch
      %1305 = sbr.rel (0) target = $region41
    $region40: #{tpu_custom_call.1} parent=1 // pred_region
      %1306 = dma.done [#allocation4], 32
    $region41: #{tpu_custom_call.1} parent=1 // pred_fallthru
      _
    %1307 = vsyncpa [#allocation3], 1
    %1308 = vsyncpa [#allocation6], 1
    %1309 = vsyncpa [#allocation9], 1
    %1310 = vsyncpa [#allocation4], 1

</llo_original>
